<compile_context>
chip_gen: v7x
topology: tpu7x:2x2x1
jax: 0.10.0
libtpu: 0.0.40
codegen_flags: <defaults>
</compile_context>

<pallas_src>
import functools

import jax
import jax.numpy as jnp
from jax.experimental import pallas as pl
from jax.experimental.pallas import tpu as pltpu

# CLIP ("openai/clip-vit-*") image normalization constants used by the
# kandinsky-2-2-prior image_processor.
CLIP_MEAN = (0.48145466, 0.4578275, 0.40821073)
CLIP_STD = (0.26862954, 0.26130258, 0.27577711)


# -----------------------------------------------------------------------------
# Fused Pallas kernel: (normalize-folded) patch-embed + mean-pool + projection + head
# -----------------------------------------------------------------------------
def _fused_encoder_head_kernel(x_ref, pw_ref, pb_ref, prw_ref, prb_ref,
                               cw_ref, cb_ref, o_ref, acc_ref, *, inv_num_patches):
    # x_ref:  (tb, tp, K)      bf16   patch pixels (normalization folded into pw)
    # pw_ref: (K, hidden)      bf16   folded patch-embed weight
    # pb_ref: (1, hidden)      f32    folded patch-embed bias
    # prw_ref:(hidden, 1280)   bf16   visual projection weight
    # prb_ref:(1, 1280)        f32    visual projection bias
    # cw_ref: (1, 1280)        f32    classifier weight row
    # cb_ref: (1, 1)           f32    classifier bias (SMEM scalar)
    # o_ref:  (tb, 1)          f32    logits
    # acc_ref:(tb, hidden)     f32    running sum over patches (mean-pool numerator)
    j = pl.program_id(1)

    @pl.when(j == 0)
    def _init():
        acc_ref[...] = jnp.zeros_like(acc_ref)

    tb, tp, k = x_ref.shape
    hidden = pw_ref.shape[1]
    # (tb*tp, K) @ (K, hidden) on the MXU, f32 accumulation.
    x = x_ref[...].reshape(tb * tp, k)
    emb = jnp.dot(x, pw_ref[...], preferred_element_type=jnp.float32)
    # Sum over this patch tile; biases are added once in the epilogue.
    acc_ref[...] += jnp.sum(emb.reshape(tb, tp, hidden), axis=1)

    @pl.when(j == pl.num_programs(1) - 1)
    def _epilogue():
        pooled = acc_ref[...] * inv_num_patches + pb_ref[...]                 # (tb, hidden) f32
        image_embeds = jnp.dot(pooled.astype(prw_ref.dtype), prw_ref[...],
                               preferred_element_type=jnp.float32) + prb_ref[...]  # (tb, 1280) f32
        # Linear(1280, 1) head as a VPU multiply + lane reduction (avoids an N=1 MXU matmul).
        logits = jnp.sum(image_embeds * cw_ref[...], axis=-1, keepdims=True) + cb_ref[0, 0]
        o_ref[...] = logits.astype(o_ref.dtype)


def _largest_divisor(n, cap, multiple_of=1):
    """Largest divisor of n that is <= cap and (a multiple of `multiple_of` or == n).
    Falls back to n (full axis) if no such divisor exists."""
    best = None
    for d in range(1, min(n, cap) + 1):
        if n % d == 0 and (d % multiple_of == 0 or d == n):
            best = d
    return best if best is not None else n


# -----------------------------------------------------------------------------
# Parameters (deterministic stand-in encoder + exact trainable head)
# -----------------------------------------------------------------------------
def init_params(key, *, in_channels=3, patch=8, hidden=256,
                embedding_dim=1280, num_classes=1):
    k1, k2, k3, k4 = jax.random.split(key, 4)
    patch_dim = in_channels * patch * patch

    def uniform(k, shape, fan_in):
        bound = 1.0 / jnp.sqrt(jnp.float32(fan_in))
        return jax.random.uniform(k, shape, jnp.float32, -bound, bound)

    return {
        # stand-in CLIP vision encoder params
        "patch_w": uniform(k1, (patch_dim, hidden), patch_dim),   # conv patch-embed as matmul
        "patch_b": jnp.zeros((1, hidden), jnp.float32),
        "proj_w": uniform(k2, (hidden, embedding_dim), hidden),   # visual projection -> image_embeds
        "proj_b": jnp.zeros((1, embedding_dim), jnp.float32),
        # trainable head, exactly as in __init__: nn.Linear(embedding_dim, num_classes)
        "cls_w": uniform(k3, (embedding_dim, num_classes), embedding_dim),
        "cls_b": uniform(k4, (1, num_classes), embedding_dim),
    }


# -----------------------------------------------------------------------------
# Forward (patch size and tile caps are STATIC -> fixes the previous trace error)
# -----------------------------------------------------------------------------
@functools.partial(jax.jit, static_argnames=("patch", "tb_max", "tp_max"))
def clip_classifier_forward(params, x, *, patch=8, tb_max=8, tp_max=128):
    """x: (B, C, H, W) float32 in [0, 1] (do_rescale=False). Returns (B, 1) float32."""
    b, c, h, w = x.shape
    p = patch
    hp, wp = h // p, w // p
    num_patches = hp * wp
    patch_dim = c * p * p
    hidden = params["patch_w"].shape[1]
    embed_dim = params["proj_w"].shape[1]
    num_classes = params["cls_w"].shape[1]
    assert num_classes == 1, "fused head assumes num_classes == 1 (module default)"

    # --- image_processor: fold per-channel CLIP normalization into the patch-embed ---
    # xn = x * (1/std) + (-mean/std); since patch-embed is linear, fold exactly:
    #   W' = diag(scale_k) @ W ,  b' = b + shift_k @ W   (k = channel-major im2col index)
    mean = jnp.asarray(CLIP_MEAN, jnp.float32)
    std = jnp.asarray(CLIP_STD, jnp.float32)
    scale_k = jnp.repeat(1.0 / std, p * p)                                  # (patch_dim,)
    shift_k = jnp.repeat(-mean / std, p * p)                                # (patch_dim,)
    patch_w = params["patch_w"] * scale_k[:, None]                          # (K, hidden)
    patch_b = params["patch_b"] + shift_k[None, :] @ params["patch_w"]      # (1, hidden)

    # --- im2col: (B, C, H, W) -> (B, P, K), channel-major within each patch ---
    patches = x.reshape(b, c, hp, p, wp, p).transpose(0, 2, 4, 1, 3, 5)
    patches = patches.reshape(b, num_patches, patch_dim)

    # bf16 MXU operands, f32 accumulation / biases.
    patches = patches.astype(jnp.bfloat16)
    patch_w = patch_w.astype(jnp.bfloat16)
    proj_w = params["proj_w"].astype(jnp.bfloat16)
    proj_b = params["proj_b"]
    cls_w_row = params["cls_w"].reshape(1, embed_dim)   # (1280, 1) -> (1, 1280)
    cls_b = params["cls_b"].reshape(1, 1)

    # Tile sizes (static): B-tile multiple of 8 (or full B), patch-tile multiple of 16
    # (bf16 sublane packing) or full P.
    tb = _largest_divisor(b, tb_max, multiple_of=8)
    tp = _largest_divisor(num_patches, tp_max, multiple_of=16)

    kernel = functools.partial(_fused_encoder_head_kernel,
                               inv_num_patches=1.0 / num_patches)

    def rep_spec(shape):  # grid-invariant full-array block (weights / biases)
        n = len(shape)
        return pl.BlockSpec(shape, lambda i, j: (0,) * n)

    out = pl.pallas_call(
        kernel,
        out_shape=jax.ShapeDtypeStruct((b, num_classes), jnp.float32),
        grid_spec=pltpu.PrefetchScalarGridSpec(
            num_scalar_prefetch=0,
            grid=(b // tb, num_patches // tp),
            in_specs=[
                pl.BlockSpec((tb, tp, patch_dim), lambda i, j: (i, j, 0)),  # patches
                rep_spec(patch_w.shape),                                    # folded patch W
                rep_spec(patch_b.shape),                                    # folded patch b
                rep_spec(proj_w.shape),                                     # projection W
                rep_spec(proj_b.shape),                                     # projection b
                rep_spec(cls_w_row.shape),                                  # head weight row
                pl.BlockSpec(memory_space=pltpu.MemorySpace.SMEM),          # head bias scalar
            ],
            out_specs=pl.BlockSpec((tb, num_classes), lambda i, j: (i, 0)),
            scratch_shapes=[pltpu.VMEM((tb, hidden), jnp.float32)],
        ),
        compiler_params=pltpu.CompilerParams(
            dimension_semantics=("parallel", "arbitrary")),
    )(patches, patch_w, patch_b, proj_w, proj_b, cls_w_row, cls_b)
    return out


# -----------------------------------------------------------------------------
# Pure-JAX f32 reference of the same stand-in math (for a sanity check)
# -----------------------------------------------------------------------------
def _reference_forward(params, x, *, patch=8):
    b, c, h, w = x.shape
    p = patch
    hp, wp = h // p, w // p
    mean = jnp.asarray(CLIP_MEAN, jnp.float32).reshape(1, c, 1, 1)
    std = jnp.asarray(CLIP_STD, jnp.float32).reshape(1, c, 1, 1)
    xn = (x - mean) / std
    patches = xn.reshape(b, c, hp, p, wp, p).transpose(0, 2, 4, 1, 3, 5)
    patches = patches.reshape(b, hp * wp, c * p * p)
    emb = patches @ params["patch_w"] + params["patch_b"]
    pooled = emb.mean(axis=1)
    image_embeds = pooled @ params["proj_w"] + params["proj_b"]
    return image_embeds @ params["cls_w"] + params["cls_b"]


if __name__ == "__main__":
    key = jax.random.PRNGKey(0)
    k_param, k_x = jax.random.split(key)

    B, C, H, W = 2, 3, 64, 64   # small demo shapes; H, W divisible by patch=8
    PATCH = 8
    params = init_params(k_param, in_channels=C, patch=PATCH)
    x = jax.random.uniform(k_x, (B, C, H, W), jnp.float32)  # images in [0, 1]

    # tp_max=16 -> 4 patch-tiles, exercising the accumulate-over-grid path.
    out = clip_classifier_forward(params, x, patch=PATCH, tb_max=8, tp_max=16)
    out = jax.block_until_ready(out)

    assert out.shape == (B, 1) and out.dtype == jnp.float32
    assert bool(jnp.all(jnp.isfinite(out)))
    ref = _reference_forward(params, x, patch=PATCH)
    assert bool(jnp.allclose(out, ref, rtol=5e-2, atol=5e-2)), (out, ref)
    print("KERNEL_OK")
</pallas_src>

<mosaic_0001>
module attributes {stable_mosaic.version = 11 : i64} {
  func.func @_fused_encoder_head_kernel(%arg0: i32, %arg1: i32, %arg2: memref<2x16x192xbf16, #tpu.memory_space<vmem>>, %arg3: memref<192x256xbf16, #tpu.memory_space<vmem>>, %arg4: memref<1x256xf32, #tpu.memory_space<vmem>>, %arg5: memref<256x1280xbf16, #tpu.memory_space<vmem>>, %arg6: memref<1x1280xf32, #tpu.memory_space<vmem>>, %arg7: memref<1x1280xf32, #tpu.memory_space<vmem>>, %arg8: memref<1x1xf32, #tpu.memory_space<smem>>, %arg9: memref<2x1xf32, #tpu.memory_space<vmem>>, %arg10: memref<2x256xf32, #tpu.memory_space<vmem>>) attributes {dimension_semantics = [#tpu.dimension_semantics<parallel>, #tpu.dimension_semantics<arbitrary>], iteration_bounds = array<i64: 1, 4>, scalar_prefetch = 0 : i64, scratch_operands = 1 : i64, tpu.core_type = #tpu.core_type<tc>, window_params = [{transform_indices = @transform_0, window_bounds = array<i64: 2, 16, 192>}, {pipeline_mode = #tpu.pipeline_mode<synchronous>, transform_indices = @transform_1, window_bounds = array<i64: 192, 256>}, {pipeline_mode = #tpu.pipeline_mode<synchronous>, transform_indices = @transform_2, window_bounds = array<i64: 1, 256>}, {pipeline_mode = #tpu.pipeline_mode<synchronous>, transform_indices = @transform_3, window_bounds = array<i64: 256, 1280>}, {pipeline_mode = #tpu.pipeline_mode<synchronous>, transform_indices = @transform_4, window_bounds = array<i64: 1, 1280>}, {pipeline_mode = #tpu.pipeline_mode<synchronous>, transform_indices = @transform_5, window_bounds = array<i64: 1, 1280>}, {transform_indices = @transform_6, window_bounds = array<i64: 1, 1>}, {transform_indices = @transform_7, window_bounds = array<i64: 2, 1>}]} {
    %c0_i32 = arith.constant 0 : i32
    %0 = arith.cmpi eq, %arg1, %c0_i32 : i32
    %1 = arith.extui %0 : i1 to i32
    %c0_i32_0 = arith.constant 0 : i32
    %2 = arith.cmpi ne, %1, %c0_i32_0 : i32
    scf.if %2 {
      %cst_11 = arith.constant 0.000000e+00 : f32
      %15 = vector.broadcast %cst_11 : f32 to vector<2x256xf32>
      %c0_12 = arith.constant 0 : index
      %c0_13 = arith.constant 0 : index
      %16 = vector.load %arg10[%c0_12, %c0_13] : memref<2x256xf32, #tpu.memory_space<vmem>>, vector<2x256xf32>
      tpu.vector_store %arg10[%c0_12, %c0_13], %15 {strides = array<i32>} : memref<2x256xf32, #tpu.memory_space<vmem>>, vector<2x256xf32>,
    } else {
    }
    %c0 = arith.constant 0 : index
    %c0_1 = arith.constant 0 : index
    %c0_2 = arith.constant 0 : index
    %3 = vector.load %arg2[%c0, %c0_1, %c0_2] : memref<2x16x192xbf16, #tpu.memory_space<vmem>>, vector<2x16x192xbf16>
    %4 = vector.shape_cast %3 : vector<2x16x192xbf16> to vector<32x192xbf16>
    %c0_3 = arith.constant 0 : index
    %c0_4 = arith.constant 0 : index
    %5 = vector.load %arg3[%c0_3, %c0_4] : memref<192x256xbf16, #tpu.memory_space<vmem>>, vector<192x256xbf16>
    %cst = arith.constant dense<0.000000e+00> : vector<32x256xf32>
    %6 = tpu.matmul %4, %5, %cst {dimension_numbers = #tpu.dot_dimension_numbers<[1], [0], [0], [1], [0, 0, 1, 1], [], []>} : vector<32x192xbf16>, vector<192x256xbf16>, vector<32x256xf32> -> vector<32x256xf32>
    %c0_5 = arith.constant 0 : index
    %c0_6 = arith.constant 0 : index
    %7 = vector.load %arg10[%c0_5, %c0_6] : memref<2x256xf32, #tpu.memory_space<vmem>>, vector<2x256xf32>
    %8 = vector.shape_cast %6 : vector<32x256xf32> to vector<2x16x256xf32>
    %cst_7 = arith.constant dense<0.000000e+00> : vector<2x256xf32>
    %9 = vector.multi_reduction <add>, %8, %cst_7 [1] : vector<2x16x256xf32> to vector<2x256xf32>
    %10 = arith.addf %7, %9 : vector<2x256xf32>
    %c0_8 = arith.constant 0 : index
    %c0_9 = arith.constant 0 : index
    %11 = vector.load %arg10[%c0_8, %c0_9] : memref<2x256xf32, #tpu.memory_space<vmem>>, vector<2x256xf32>
    tpu.vector_store %arg10[%c0_8, %c0_9], %10 {strides = array<i32>} : memref<2x256xf32, #tpu.memory_space<vmem>>, vector<2x256xf32>,
    %c3_i32 = arith.constant 3 : i32
    %12 = arith.cmpi eq, %arg1, %c3_i32 : i32
    %13 = arith.extui %12 : i1 to i32
    %c0_i32_10 = arith.constant 0 : i32
    %14 = arith.cmpi ne, %13, %c0_i32_10 : i32
    scf.if %14 {
      %c0_11 = arith.constant 0 : index
      %c0_12 = arith.constant 0 : index
      %15 = vector.load %arg10[%c0_11, %c0_12] : memref<2x256xf32, #tpu.memory_space<vmem>>, vector<2x256xf32>
      %cst_13 = arith.constant 1.562500e-02 : f32
      %16 = vector.broadcast %cst_13 : f32 to vector<2x256xf32>
      %17 = arith.mulf %15, %16 : vector<2x256xf32>
      %c0_14 = arith.constant 0 : index
      %c0_15 = arith.constant 0 : index
      %18 = vector.load %arg4[%c0_14, %c0_15] : memref<1x256xf32, #tpu.memory_space<vmem>>, vector<1x256xf32>
      %19 = vector.broadcast %18 : vector<1x256xf32> to vector<2x256xf32>
      %20 = arith.addf %17, %19 : vector<2x256xf32>
      %21 = arith.truncf %20 : vector<2x256xf32> to vector<2x256xbf16>
      %c0_16 = arith.constant 0 : index
      %c0_17 = arith.constant 0 : index
      %22 = vector.load %arg5[%c0_16, %c0_17] : memref<256x1280xbf16, #tpu.memory_space<vmem>>, vector<256x1280xbf16>
      %cst_18 = arith.constant dense<0.000000e+00> : vector<2x1280xf32>
      %23 = tpu.matmul %21, %22, %cst_18 {dimension_numbers = #tpu.dot_dimension_numbers<[1], [0], [0], [1], [0, 0, 1, 1], [], []>} : vector<2x256xbf16>, vector<256x1280xbf16>, vector<2x1280xf32> -> vector<2x1280xf32>
      %c0_19 = arith.constant 0 : index
      %c0_20 = arith.constant 0 : index
      %24 = vector.load %arg6[%c0_19, %c0_20] : memref<1x1280xf32, #tpu.memory_space<vmem>>, vector<1x1280xf32>
      %25 = vector.broadcast %24 : vector<1x1280xf32> to vector<2x1280xf32>
      %26 = arith.addf %23, %25 : vector<2x1280xf32>
      %c0_21 = arith.constant 0 : index
      %c0_22 = arith.constant 0 : index
      %27 = vector.load %arg7[%c0_21, %c0_22] : memref<1x1280xf32, #tpu.memory_space<vmem>>, vector<1x1280xf32>
      %28 = vector.broadcast %27 : vector<1x1280xf32> to vector<2x1280xf32>
      %29 = arith.mulf %26, %28 : vector<2x1280xf32>
      %cst_23 = arith.constant dense<0.000000e+00> : vector<2xf32>
      %30 = vector.multi_reduction <add>, %29, %cst_23 [1] : vector<2x1280xf32> to vector<2xf32>
      %31 = vector.shape_cast %30 : vector<2xf32> to vector<2x1xf32>
      %c0_24 = arith.constant 0 : index
      %c0_25 = arith.constant 0 : index
      %32 = memref.load %arg8[%c0_24, %c0_25] : memref<1x1xf32, #tpu.memory_space<smem>>
      %33 = vector.broadcast %32 : f32 to vector<2x1xf32>
      %34 = arith.addf %31, %33 : vector<2x1xf32>
      %c0_26 = arith.constant 0 : index
      %c0_27 = arith.constant 0 : index
      %35 = vector.load %arg9[%c0_26, %c0_27] : memref<2x1xf32, #tpu.memory_space<vmem>>, vector<2x1xf32>
      tpu.vector_store %arg9[%c0_26, %c0_27], %34 {strides = array<i32>} : memref<2x1xf32, #tpu.memory_space<vmem>>, vector<2x1xf32>,
    } else {
    }
    return
  }
  func.func @transform_0(%arg0: i32, %arg1: i32) -> (i32, i32, i32) {
    %c0_i32 = arith.constant 0 : i32
    %c0_i32_0 = arith.constant 0 : i32
    return %arg0, %arg1, %c0_i32 : i32, i32, i32
  }
  func.func @transform_1(%arg0: i32, %arg1: i32) -> (i32, i32) {
    %c0_i32 = arith.constant 0 : i32
    %c0_i32_0 = arith.constant 0 : i32
    %c0_i32_1 = arith.constant 0 : i32
    return %c0_i32, %c0_i32_0 : i32, i32
  }
  func.func @transform_2(%arg0: i32, %arg1: i32) -> (i32, i32) {
    %c0_i32 = arith.constant 0 : i32
    %c0_i32_0 = arith.constant 0 : i32
    %c0_i32_1 = arith.constant 0 : i32
    return %c0_i32, %c0_i32_0 : i32, i32
  }
  func.func @transform_3(%arg0: i32, %arg1: i32) -> (i32, i32) {
    %c0_i32 = arith.constant 0 : i32
    %c0_i32_0 = arith.constant 0 : i32
    %c0_i32_1 = arith.constant 0 : i32
    return %c0_i32, %c0_i32_0 : i32, i32
  }
  func.func @transform_4(%arg0: i32, %arg1: i32) -> (i32, i32) {
    %c0_i32 = arith.constant 0 : i32
    %c0_i32_0 = arith.constant 0 : i32
    %c0_i32_1 = arith.constant 0 : i32
    return %c0_i32, %c0_i32_0 : i32, i32
  }
  func.func @transform_5(%arg0: i32, %arg1: i32) -> (i32, i32) {
    %c0_i32 = arith.constant 0 : i32
    %c0_i32_0 = arith.constant 0 : i32
    %c0_i32_1 = arith.constant 0 : i32
    return %c0_i32, %c0_i32_0 : i32, i32
  }
  func.func @transform_6(%arg0: i32, %arg1: i32) -> (i32, i32) {
    %c0_i32 = arith.constant 0 : i32
    %c0_i32_0 = arith.constant 0 : i32
    %c0_i32_1 = arith.constant 0 : i32
    return %c0_i32, %c0_i32_0 : i32, i32
  }
  func.func @transform_7(%arg0: i32, %arg1: i32) -> (i32, i32) {
    %c0_i32 = arith.constant 0 : i32
    %c0_i32_0 = arith.constant 0 : i32
    return %arg0, %c0_i32 : i32, i32
  }
}

</mosaic_0001>

<llo_original>
// kernel: clip_classifier_forward.1
$region0: #{clip_classifier_forward.1}
  #allocation0 [shape = 'u32[]', space=smem, size = 0x4, offset = 0x4, fixed_abs, tag = 'smem constant byte address 0x4 - core index']
  #allocation1 [shape = 'u32[144,128]{1,0:T(1,128)}', space=vmem, size = 0x12000, scoped, tag = 'internal scratch']
  #allocation2 [shape = 'f32[2,256]{1,0:T(2,128)}', space=vmem, size = 0x800, scoped, tag = 'scratch operand']
  #allocation3 [shape = 'f32[1,1]{1,0:T(1,128)S(6)}', space=smem, size = 0x200, scoped, tag = 'scoped memory for clip_classifier_forward.1']
  %s0 = inlined_call_operand.vmem [shape: bf16[2,64,192], index: 0, kind: input, shape index: {}]
  %s1 = inlined_call_operand.vmem [shape: bf16[192,256], index: 1, kind: input, shape index: {}]
  %s2 = inlined_call_operand.vmem [shape: f32[1,256], index: 2, kind: input, shape index: {}]
  %s3 = inlined_call_operand.vmem [shape: bf16[256,1280], index: 3, kind: input, shape index: {}]
  %s4 = inlined_call_operand.vmem [shape: f32[1,1280], index: 4, kind: input, shape index: {}]
  %s5 = inlined_call_operand.vmem [shape: f32[1,1280], index: 5, kind: input, shape index: {}]
  %s6 = inlined_call_operand.<no memory space> [shape: f32[1,1], index: 6, kind: input, shape index: {}]
  %s7 = inlined_call_operand.vmem [shape: f32[2,1], index: 7, kind: output, shape index: {}]
  %s8 = sld [smem:[#allocation0]]
  $region107: #{clip_classifier_forward.1} parent=0
    _
  %s10 = ssub.s32 1, %s8
  %s11 = scalar_select 0, %s10, %s8
  %12 = sst [smem:[#allocation3]] %s6
  $region1: #{clip_classifier_forward.1} parent=0
    #allocation4 [shape = 'u8[32768]{0}', space=vmem, size = 0x8000, scoped, tag = 'input window, operand 0']
    loop: start=0, step=1, limit=6
    $region2: #{clip_classifier_forward.1} parent=1 // loop_pre_header
      _
    $region3: #{clip_classifier_forward.1} parent=1 // loop_header
      %s14 = sphi 0, %s18
      %p15 = scmp.ge.s32.totalorder %s14, 6
      %s21 = sphi 0, %s33
      %s22 = sphi 0, %s29
      %s23 = sphi 0, %s21
      %s24 = sphi 0, %s22
      %s25 = sphi 0, %s23
      %s26 = sphi 0, %s24
      %s38 = sphi 0, %s40
      %s41 = sphi 0, %s38
      %s42 = sphi 0, %s41
      %s58 = sphi 0, %s42
      %s62 = sphi 0, %s62
      %s64 = sphi 0, %s62
      %s65 = sphi 0, %s64
      %s79 = sphi 0, %s65
      %s83 = sphi 0, %s83
      %s85 = sphi 0, %s83
      %s86 = sphi 0, %s85
      %s100 = sphi 0, %s86
      %s104 = sphi 0, %s104
      %s106 = sphi 0, %s104
      %s107 = sphi 0, %s106
      %s121 = sphi 0, %s107
      %s125 = sphi 0, %s125
      %s127 = sphi 0, %s125
      %s128 = sphi 0, %s127
      %s142 = sphi 0, %s128
      %s146 = sphi 0, %s146
      %s148 = sphi 0, %s146
      %s149 = sphi 0, %s148
      %s163 = sphi 0, %s149
      %s167 = sphi 0, %s167
      %s169 = sphi 0, %s167
      %s170 = sphi 0, %s169
      %s184 = sphi 0, %s170
      %s190 = sphi 0, %s192
      %s193 = sphi 0, %s190
      %s194 = sphi 0, %s193
      %s210 = sphi 0, %s194
    $region4: #{clip_classifier_forward.1} parent=1 // loop_header_branch
      %17 = sbr.rel (%p15) target = $region8
    $region5: #{clip_classifier_forward.1} parent=1 // loop_body
      %s19 = ssub.s32 %s14, 1
      %s20 = ssub.s32 %s14, 2
      %s27 = sadd.s32 1, %s22
      %p28 = scmp.ge.s32.totalorder %s27, 4
      %s29 = scalar_select %p28, 0, %s27
      %s30 = sadd.s32 1, %s21
      %s31 = scalar_select %p28, %s30, %s21
      %p32 = scmp.ge.s32.totalorder %s31, 1
      %s33 = scalar_select %p32, 0, %s31
      %s34 = ssub.s32 %s21, %s33
      %s35 = ssub.s32 %s22, %s29
      %s36 = sor.u32 %s34, %s35
      %p37 = scmp.eq.s32.totalorder %s36, 0
      %s39 = sadd.s32 %s38, 1
      %s40 = scalar_select %p37, %s38, %s39
      %p43 = pneg %p37
      %p44 = scmp.eq.s32.totalorder %s14, 3
      %p45 = por %p43, %p44
      %p46 = scmp.ne.s32.totalorder %s38, %s41
      %p47 = scmp.eq.s32.totalorder %s14, 0
      %p48 = por %p46, %p47
      %p49 = scmp.ne.s32.totalorder %s38, %s41
      %p50 = scmp.eq.s32.totalorder %s19, 3
      %p51 = por %p49, %p50
      %p52 = scmp.ne.s32.totalorder %s41, %s42
      %p53 = scmp.eq.s32.totalorder %s19, 0
      %p54 = por %p52, %p53
      %p55 = scmp.ne.s32.totalorder %s41, %s42
      %p56 = scmp.eq.s32.totalorder %s20, 3
      %p57 = por %p55, %p56
      %p59 = scmp.ne.s32.totalorder %s42, %s58
      %p60 = scmp.eq.s32.totalorder %s20, 0
      %p61 = por %p59, %p60
      %s63 = sadd.s32 %s62, 1
      %p66 = scmp.eq.s32.totalorder %s14, 3
      %p67 = scmp.ne.s32.totalorder %s62, %s64
      %p68 = scmp.eq.s32.totalorder %s14, 0
      %p69 = por %p67, %p68
      %p70 = scmp.ne.s32.totalorder %s62, %s64
      %p71 = scmp.eq.s32.totalorder %s19, 3
      %p72 = por %p70, %p71
      %p73 = scmp.ne.s32.totalorder %s64, %s65
      %p74 = scmp.eq.s32.totalorder %s19, 0
      %p75 = por %p73, %p74
      %p76 = scmp.ne.s32.totalorder %s64, %s65
      %p77 = scmp.eq.s32.totalorder %s20, 3
      %p78 = por %p76, %p77
      %p80 = scmp.ne.s32.totalorder %s65, %s79
      %p81 = scmp.eq.s32.totalorder %s20, 0
      %p82 = por %p80, %p81
      %s84 = sadd.s32 %s83, 1
      %p87 = scmp.eq.s32.totalorder %s14, 3
      %p88 = scmp.ne.s32.totalorder %s83, %s85
      %p89 = scmp.eq.s32.totalorder %s14, 0
      %p90 = por %p88, %p89
      %p91 = scmp.ne.s32.totalorder %s83, %s85
      %p92 = scmp.eq.s32.totalorder %s19, 3
      %p93 = por %p91, %p92
      %p94 = scmp.ne.s32.totalorder %s85, %s86
      %p95 = scmp.eq.s32.totalorder %s19, 0
      %p96 = por %p94, %p95
      %p97 = scmp.ne.s32.totalorder %s85, %s86
      %p98 = scmp.eq.s32.totalorder %s20, 3
      %p99 = por %p97, %p98
      %p101 = scmp.ne.s32.totalorder %s86, %s100
      %p102 = scmp.eq.s32.totalorder %s20, 0
      %p103 = por %p101, %p102
      %s105 = sadd.s32 %s104, 1
      %p108 = scmp.eq.s32.totalorder %s14, 3
      %p109 = scmp.ne.s32.totalorder %s104, %s106
      %p110 = scmp.eq.s32.totalorder %s14, 0
      %p111 = por %p109, %p110
      %p112 = scmp.ne.s32.totalorder %s104, %s106
      %p113 = scmp.eq.s32.totalorder %s19, 3
      %p114 = por %p112, %p113
      %p115 = scmp.ne.s32.totalorder %s106, %s107
      %p116 = scmp.eq.s32.totalorder %s19, 0
      %p117 = por %p115, %p116
      %p118 = scmp.ne.s32.totalorder %s106, %s107
      %p119 = scmp.eq.s32.totalorder %s20, 3
      %p120 = por %p118, %p119
      %p122 = scmp.ne.s32.totalorder %s107, %s121
      %p123 = scmp.eq.s32.totalorder %s20, 0
      %p124 = por %p122, %p123
      %s126 = sadd.s32 %s125, 1
      %p129 = scmp.eq.s32.totalorder %s14, 3
      %p130 = scmp.ne.s32.totalorder %s125, %s127
      %p131 = scmp.eq.s32.totalorder %s14, 0
      %p132 = por %p130, %p131
      %p133 = scmp.ne.s32.totalorder %s125, %s127
      %p134 = scmp.eq.s32.totalorder %s19, 3
      %p135 = por %p133, %p134
      %p136 = scmp.ne.s32.totalorder %s127, %s128
      %p137 = scmp.eq.s32.totalorder %s19, 0
      %p138 = por %p136, %p137
      %p139 = scmp.ne.s32.totalorder %s127, %s128
      %p140 = scmp.eq.s32.totalorder %s20, 3
      %p141 = por %p139, %p140
      %p143 = scmp.ne.s32.totalorder %s128, %s142
      %p144 = scmp.eq.s32.totalorder %s20, 0
      %p145 = por %p143, %p144
      %s147 = sadd.s32 %s146, 1
      %p150 = scmp.eq.s32.totalorder %s14, 3
      %p151 = scmp.ne.s32.totalorder %s146, %s148
      %p152 = scmp.eq.s32.totalorder %s14, 0
      %p153 = por %p151, %p152
      %p154 = scmp.ne.s32.totalorder %s146, %s148
      %p155 = scmp.eq.s32.totalorder %s19, 3
      %p156 = por %p154, %p155
      %p157 = scmp.ne.s32.totalorder %s148, %s149
      %p158 = scmp.eq.s32.totalorder %s19, 0
      %p159 = por %p157, %p158
      %p160 = scmp.ne.s32.totalorder %s148, %s149
      %p161 = scmp.eq.s32.totalorder %s20, 3
      %p162 = por %p160, %p161
      %p164 = scmp.ne.s32.totalorder %s149, %s163
      %p165 = scmp.eq.s32.totalorder %s20, 0
      %p166 = por %p164, %p165
      %s168 = sadd.s32 %s167, 1
      %p171 = scmp.eq.s32.totalorder %s14, 3
      %p172 = scmp.ne.s32.totalorder %s167, %s169
      %p173 = scmp.eq.s32.totalorder %s14, 0
      %p174 = por %p172, %p173
      %p175 = scmp.ne.s32.totalorder %s167, %s169
      %p176 = scmp.eq.s32.totalorder %s19, 3
      %p177 = por %p175, %p176
      %p178 = scmp.ne.s32.totalorder %s169, %s170
      %p179 = scmp.eq.s32.totalorder %s19, 0
      %p180 = por %p178, %p179
      %p181 = scmp.ne.s32.totalorder %s169, %s170
      %p182 = scmp.eq.s32.totalorder %s20, 3
      %p183 = por %p181, %p182
      %p185 = scmp.ne.s32.totalorder %s170, %s184
      %p186 = scmp.eq.s32.totalorder %s20, 0
      %p187 = por %p185, %p186
      %s188 = ssub.s32 %s21, %s33
      %p189 = scmp.eq.s32.totalorder %s188, 0
      %s191 = sadd.s32 %s190, 1
      %s192 = scalar_select %p189, %s190, %s191
      %p195 = pneg %p189
      %p196 = scmp.eq.s32.totalorder %s14, 3
      %p197 = por %p195, %p196
      %p198 = scmp.ne.s32.totalorder %s190, %s193
      %p199 = scmp.eq.s32.totalorder %s14, 0
      %p200 = por %p198, %p199
      %p201 = scmp.ne.s32.totalorder %s190, %s193
      %p202 = scmp.eq.s32.totalorder %s19, 3
      %p203 = por %p201, %p202
      %p204 = scmp.ne.s32.totalorder %s193, %s194
      %p205 = scmp.eq.s32.totalorder %s19, 0
      %p206 = por %p204, %p205
      %p207 = scmp.ne.s32.totalorder %s193, %s194
      %p208 = scmp.eq.s32.totalorder %s20, 3
      %p209 = por %p207, %p208
      %p211 = scmp.ne.s32.totalorder %s194, %s210
      %p212 = scmp.eq.s32.totalorder %s20, 0
      %p213 = por %p211, %p212
      %p214 = scmp.le.s32.totalorder 1, %s14
      %p215 = scmp.lt.s32.totalorder %s14, 5
      %p216 = pnand %p214, %p215
      %p217 = pneg %p216
      // Predicated region
      $region9: #{clip_classifier_forward.1} parent=5 // pred_check
        _
      $region10: #{clip_classifier_forward.1} parent=5 // pred_check_branch
        %219 = sbr.rel (%p216) target = $region12
      $region11: #{clip_classifier_forward.1} parent=5 // pred_region
        %s220 = ssub.s32 %s14, 1
        // Predicated region
        $region13: #{clip_classifier_forward.1} parent=11 // pred_check
          %p221 = pneg %p75
        $region14: #{clip_classifier_forward.1} parent=11 // pred_check_branch
          %223 = sbr.rel (%p221) target = $region16
        $region15: #{clip_classifier_forward.1} parent=11 // pred_region
          _
        $region16: #{clip_classifier_forward.1} parent=11 // pred_fallthru
          _
        // Predicated region
        $region17: #{clip_classifier_forward.1} parent=11 // pred_check
          %p224 = pneg %p96
        $region18: #{clip_classifier_forward.1} parent=11 // pred_check_branch
          %226 = sbr.rel (%p224) target = $region20
        $region19: #{clip_classifier_forward.1} parent=11 // pred_region
          _
        $region20: #{clip_classifier_forward.1} parent=11 // pred_fallthru
          _
        // Predicated region
        $region21: #{clip_classifier_forward.1} parent=11 // pred_check
          %p227 = pneg %p117
        $region22: #{clip_classifier_forward.1} parent=11 // pred_check_branch
          %229 = sbr.rel (%p227) target = $region24
        $region23: #{clip_classifier_forward.1} parent=11 // pred_region
          _
        $region24: #{clip_classifier_forward.1} parent=11 // pred_fallthru
          _
        // Predicated region
        $region25: #{clip_classifier_forward.1} parent=11 // pred_check
          %p230 = pneg %p138
        $region26: #{clip_classifier_forward.1} parent=11 // pred_check_branch
          %232 = sbr.rel (%p230) target = $region28
        $region27: #{clip_classifier_forward.1} parent=11 // pred_region
          _
        $region28: #{clip_classifier_forward.1} parent=11 // pred_fallthru
          _
        // Predicated region
        $region29: #{clip_classifier_forward.1} parent=11 // pred_check
          %p233 = pneg %p159
        $region30: #{clip_classifier_forward.1} parent=11 // pred_check_branch
          %235 = sbr.rel (%p233) target = $region32
        $region31: #{clip_classifier_forward.1} parent=11 // pred_region
          _
        $region32: #{clip_classifier_forward.1} parent=11 // pred_fallthru
          _
        // Predicated region
        $region33: #{clip_classifier_forward.1} parent=11 // pred_check
          %p236 = pneg %p180
        $region34: #{clip_classifier_forward.1} parent=11 // pred_check_branch
          %238 = sbr.rel (%p236) target = $region36
        $region35: #{clip_classifier_forward.1} parent=11 // pred_region
          _
        $region36: #{clip_classifier_forward.1} parent=11 // pred_fallthru
          _
      $region12: #{clip_classifier_forward.1} parent=5 // pred_fallthru
        _
      %p239 = scmp.lt.s32.totalorder %s14, 4
      // Predicated region
      $region37: #{clip_classifier_forward.1} parent=5 // pred_check
        %p240 = pneg %p239
      $region38: #{clip_classifier_forward.1} parent=5 // pred_check_branch
        %242 = sbr.rel (%p240) target = $region40
      $region39: #{clip_classifier_forward.1} parent=5 // pred_region
        // Predicated region
        $region41: #{clip_classifier_forward.1} parent=39 // pred_check
          %p243 = pneg %p48
        $region42: #{clip_classifier_forward.1} parent=39 // pred_check_branch
          %245 = sbr.rel (%p243) target = $region44
        $region43: #{clip_classifier_forward.1} parent=39 // pred_region
          %s246 = sand.u32 %s38, 1
          %s247 = sand.u32 %s38, 1
          %s248 = smul.addr %s247, 32
          %s249 = scalar_lea.vmem [#allocation4], %s248
          %s250 = smul.u32 2, %s21
          %s251 = smul.u32 2, %s22
          %s252 = smul.addr %s251, 2
          %s253 = smul.addr %s250, 16
          %s254 = sadd.s32 %s252, %s253
          %s255 = smul.addr %s254, 4
          %s256 = scalar_lea.vmem %s0, %s255
          // Predicated region
          $region45: #{clip_classifier_forward.1} parent=43 // pred_check
            _
          $region46: #{clip_classifier_forward.1} parent=43 // pred_check_branch
            %258 = sbr.rel (0) target = $region48
          $region47: #{clip_classifier_forward.1} parent=43 // pred_region
            // Predicated region
            $region49: #{clip_classifier_forward.1} parent=47 // pred_check
              _
            $region50: #{clip_classifier_forward.1} parent=47 // pred_check_branch
              %260 = sbr.rel (0) target = $region52
            $region51: #{clip_classifier_forward.1} parent=47 // pred_region
              // Predicated region
              $region64: #{clip_classifier_forward.1} parent=51 // pred_check
                _
              $region65: #{clip_classifier_forward.1} parent=51 // pred_check_branch
                %281 = sbr.rel (0) target = $region67
              $region66: #{clip_classifier_forward.1} parent=51 // pred_region
                loop: start=0, step=1, limit=1
                $region68: #{clip_classifier_forward.1} parent=66 // loop_pre_header
                  _
                $region69: #{clip_classifier_forward.1} parent=66 // loop_header
                  %s283 = sphi 0, %s287
                  %p284 = scmp.ge.s32.totalorder %s283, 1
                  %s288 = sphi %s256, %s256
                  %s289 = sphi %s249, %s249
                $region70: #{clip_classifier_forward.1} parent=66 // loop_header_branch
                  %286 = sbr.rel (%p284) target = $region74
                $region71: #{clip_classifier_forward.1} parent=66 // loop_body
                  %v290 = vld [vmem:[%s288] sm:$0xff]
                  %291 = vst [vmem:[%s289] sm:$0xff] %v290
                  %v292 = vld [vmem:[%s288 + $0x8] sm:$0xff]
                  %293 = vst [vmem:[%s289 + $0x8] sm:$0xff] %v292
                  %v294 = vld [vmem:[%s288 + $0x40] sm:$0xff]
                  %295 = vst [vmem:[%s289 + $0x10] sm:$0xff] %v294
                  %v296 = vld [vmem:[%s288 + $0x48] sm:$0xff]
                  %297 = vst [vmem:[%s289 + $0x18] sm:$0xff] %v296
                $region72: #{clip_classifier_forward.1} parent=66 // loop_footer
                  %s287 = sadd.s32 1, %s283
                $region73: #{clip_classifier_forward.1} parent=66 // loop_footer_branch
                  %282 = sbr.rel target = $region69
                $region74: #{clip_classifier_forward.1} parent=66 // loop_exit
                  _
              $region67: #{clip_classifier_forward.1} parent=51 // pred_fallthru
                _
              // Predicated region
              $region75: #{clip_classifier_forward.1} parent=51 // pred_check
                _
              $region76: #{clip_classifier_forward.1} parent=51 // pred_check_branch
                %299 = sbr.rel target = $region78
              $region77: #{clip_classifier_forward.1} parent=51 // pred_region
                _
              $region78: #{clip_classifier_forward.1} parent=51 // pred_fallthru
                _
            $region52: #{clip_classifier_forward.1} parent=47 // pred_fallthru
              _
            // Predicated region
            $region53: #{clip_classifier_forward.1} parent=47 // pred_check
              _
            $region54: #{clip_classifier_forward.1} parent=47 // pred_check_branch
              %262 = sbr.rel target = $region56
            $region55: #{clip_classifier_forward.1} parent=47 // pred_region
              loop: start=0, step=1, limit=1
              $region57: #{clip_classifier_forward.1} parent=55 // loop_pre_header
                _
              $region58: #{clip_classifier_forward.1} parent=55 // loop_header
                %s265 = sphi 0, %s269
                %p266 = scmp.ge.s32.totalorder %s265, 1
                %s270 = sphi %s256, %s256
                %s271 = sphi %s249, %s249
              $region59: #{clip_classifier_forward.1} parent=55 // loop_header_branch
                %268 = sbr.rel (%p266) target = $region63
              $region60: #{clip_classifier_forward.1} parent=55 // loop_body
                %v272 = vld [vmem:[%s270] sm:$0xff]
                %273 = vst [vmem:[%s271] sm:$0xff] %v272
                %v274 = vld [vmem:[%s270 + $0x8] sm:$0xff]
                %275 = vst [vmem:[%s271 + $0x8] sm:$0xff] %v274
                %v276 = vld [vmem:[%s270 + $0x40] sm:$0xff]
                %277 = vst [vmem:[%s271 + $0x10] sm:$0xff] %v276
                %v278 = vld [vmem:[%s270 + $0x48] sm:$0xff]
                %279 = vst [vmem:[%s271 + $0x18] sm:$0xff] %v278
              $region61: #{clip_classifier_forward.1} parent=55 // loop_footer
                %s269 = sadd.s32 1, %s265
              $region62: #{clip_classifier_forward.1} parent=55 // loop_footer_branch
                %264 = sbr.rel target = $region58
              $region63: #{clip_classifier_forward.1} parent=55 // loop_exit
                _
            $region56: #{clip_classifier_forward.1} parent=47 // pred_fallthru
              _
          $region48: #{clip_classifier_forward.1} parent=43 // pred_fallthru
            _
          %300 = vnop
        $region44: #{clip_classifier_forward.1} parent=39 // pred_fallthru
          _
      $region40: #{clip_classifier_forward.1} parent=5 // pred_fallthru
        _
      %p301 = scmp.le.s32.totalorder 1, %s14
      %p302 = scmp.lt.s32.totalorder %s14, 5
      %p303 = pnand %p301, %p302
      %p304 = pneg %p303
      // Predicated region
      $region79: #{clip_classifier_forward.1} parent=5 // pred_check
        _
      $region80: #{clip_classifier_forward.1} parent=5 // pred_check_branch
        %306 = sbr.rel (%p303) target = $region82
      $region81: #{clip_classifier_forward.1} parent=5 // pred_region
        %s307 = ssub.s32 %s14, 1
        %s308 = sand.u32 %s41, 1
        %s309 = sand.u32 %s41, 1
        %s310 = smul.addr %s309, 32
        %s311 = scalar_lea.vmem [#allocation4], %s310
        // Predicated region
        $region83: #{clip_classifier_forward.1} parent=81 // pred_check
          %p312 = pneg %p54
        $region84: #{clip_classifier_forward.1} parent=81 // pred_check_branch
          %314 = sbr.rel (%p312) target = $region86
        $region85: #{clip_classifier_forward.1} parent=81 // pred_region
          _
        $region86: #{clip_classifier_forward.1} parent=81 // pred_fallthru
          _
        %s315 = sand.u32 %s41, 1
        %s316 = sand.u32 %s41, 1
        %s317 = smul.addr %s316, 32
        %s318 = scalar_lea.vmem [#allocation4], %s317
        %p319 = pneg %p54
        %p320 = pneg %p51
        %p321 = pneg %p75
        %p322 = pneg %p72
        %p323 = pneg %p96
        %p324 = pneg %p93
        %p325 = pneg %p117
        %p326 = pneg %p114
        %p327 = pneg %p138
        %p328 = pneg %p135
        %p329 = pneg %p159
        %p330 = pneg %p156
        %p331 = pneg %p180
        %p332 = pneg %p177
        %p333 = pneg %p206
        %p334 = pneg %p203
        %p335 = scmp.lt.s32.totalorder %s23, 0
        %s336 = scalar_select %p335, %s23, 0
        %s337 = smul.addr %s336, 2
        %s338 = scalar_lea.vmem %s7, %s337
        %s339 = smul.u32 2, %s23
        %s340 = smul.u32 2, %s24
        %p341 = scmp.lt.s32.totalorder %s23, 0
        %s342 = scalar_select %p341, %s23, 0
        %s343 = smul.addr %s342, 2
        %s344 = scalar_lea.vmem %s7, %s343
        %p346 = scmp.eq.s32.totalorder %s24, 0
        // Predicated region
        $region87: #{clip_classifier_forward.1} parent=81 // pred_check
          %p347 = pneg %p346
        $region88: #{clip_classifier_forward.1} parent=81 // pred_check_branch
          %349 = sbr.rel (%p347) target = $region90
        $region89: #{clip_classifier_forward.1} parent=81 // pred_region
          %350 = vst [vmem:[#allocation2] sm:$0xf] 0.0
        $region90: #{clip_classifier_forward.1} parent=81 // pred_fallthru
          _
        %v351 = vld [vmem:[%s311] sm:$0xff]
        %v352 = vld [vmem:[%s311 + $0x8] sm:$0xff]
        %v353 = vld [vmem:[%s311 + $0x10] sm:$0xff]
        %v354 = vld [vmem:[%s311 + $0x18] sm:$0xff]
        %v355 = vld [vmem:[%s1] sm:$0xff]
        %v356 = vld [vmem:[%s1 + $0x8] sm:$0xff]
        %v357 = vld [vmem:[%s1 + $0x10] sm:$0xff]
        %v358 = vld [vmem:[%s1 + $0x18] sm:$0xff]
        %v359 = vld [vmem:[%s1 + $0x20] sm:$0xff]
        %v360 = vld [vmem:[%s1 + $0x28] sm:$0xff]
        %v361 = vld [vmem:[%s1 + $0x30] sm:$0xff]
        %v362 = vld [vmem:[%s1 + $0x38] sm:$0xff]
        %v363 = vld [vmem:[%s1 + $0x40] sm:$0xff]
        %v364 = vld [vmem:[%s1 + $0x48] sm:$0xff]
        %v365 = vld [vmem:[%s1 + $0x50] sm:$0xff]
        %v366 = vld [vmem:[%s1 + $0x58] sm:$0xff]
        %v367 = vld [vmem:[%s1 + $0x60] sm:$0xff]
        %v368 = vld [vmem:[%s1 + $0x68] sm:$0xff]
        %v369 = vld [vmem:[%s1 + $0x70] sm:$0xff]
        %v370 = vld [vmem:[%s1 + $0x78] sm:$0xff]
        %v371 = vld [vmem:[%s1 + $0x80] sm:$0xff]
        %v372 = vld [vmem:[%s1 + $0x88] sm:$0xff]
        %v373 = vld [vmem:[%s1 + $0x90] sm:$0xff]
        %v374 = vld [vmem:[%s1 + $0x98] sm:$0xff]
        %v375 = vld [vmem:[%s1 + $0xa0] sm:$0xff]
        %v376 = vld [vmem:[%s1 + $0xa8] sm:$0xff]
        %v377 = vld [vmem:[%s1 + $0xb0] sm:$0xff]
        %v378 = vld [vmem:[%s1 + $0xb8] sm:$0xff]
        %v383 = vunpack.c.l.b16 %v351
        %v384 = vunpack.c.h.b16 %v351
        %v385 = vunpack.c.l.b16 %v352
        %v386 = vunpack.c.h.b16 %v352
        %v387 = vunpack.c.l.b16 %v353
        %v388 = vunpack.c.h.b16 %v353
        %v389 = vunpack.c.l.b16 %v354
        %v390 = vunpack.c.h.b16 %v354
        %v391 = vpack.c.b16 %v385, %v383
        %v392 = vpack.c.b16 %v386, %v384
        %v393 = vpack.c.b16 %v389, %v387
        %v394 = vpack.c.b16 %v390, %v388
        %v421 = vunpack.c.l.b16 %v355
        %v422 = vunpack.c.h.b16 %v355
        %v423 = vunpack.c.l.b16 %v356
        %v424 = vunpack.c.h.b16 %v356
        %v425 = vunpack.c.l.b16 %v357
        %v426 = vunpack.c.h.b16 %v357
        %v427 = vunpack.c.l.b16 %v358
        %v428 = vunpack.c.h.b16 %v358
        %v429 = vunpack.c.l.b16 %v359
        %v430 = vunpack.c.h.b16 %v359
        %v431 = vunpack.c.l.b16 %v360
        %v432 = vunpack.c.h.b16 %v360
        %v433 = vunpack.c.l.b16 %v361
        %v434 = vunpack.c.h.b16 %v361
        %v435 = vunpack.c.l.b16 %v362
        %v436 = vunpack.c.h.b16 %v362
        %v437 = vunpack.c.l.b16 %v363
        %v438 = vunpack.c.h.b16 %v363
        %v439 = vunpack.c.l.b16 %v364
        %v440 = vunpack.c.h.b16 %v364
        %v441 = vunpack.c.l.b16 %v365
        %v442 = vunpack.c.h.b16 %v365
        %v443 = vunpack.c.l.b16 %v366
        %v444 = vunpack.c.h.b16 %v366
        %v445 = vunpack.c.l.b16 %v367
        %v446 = vunpack.c.h.b16 %v367
        %v447 = vunpack.c.l.b16 %v368
        %v448 = vunpack.c.h.b16 %v368
        %v449 = vunpack.c.l.b16 %v369
        %v450 = vunpack.c.h.b16 %v369
        %v451 = vunpack.c.l.b16 %v370
        %v452 = vunpack.c.h.b16 %v370
        %v453 = vunpack.c.l.b16 %v371
        %v454 = vunpack.c.h.b16 %v371
        %v455 = vunpack.c.l.b16 %v372
        %v456 = vunpack.c.h.b16 %v372
        %v457 = vunpack.c.l.b16 %v373
        %v458 = vunpack.c.h.b16 %v373
        %v459 = vunpack.c.l.b16 %v374
        %v460 = vunpack.c.h.b16 %v374
        %v461 = vunpack.c.l.b16 %v375
        %v462 = vunpack.c.h.b16 %v375
        %v463 = vunpack.c.l.b16 %v376
        %v464 = vunpack.c.h.b16 %v376
        %v465 = vunpack.c.l.b16 %v377
        %v466 = vunpack.c.h.b16 %v377
        %v467 = vunpack.c.l.b16 %v378
        %v468 = vunpack.c.h.b16 %v378
        %v469 = vpack.c.b16 %v423, %v421
        %v470 = vpack.c.b16 %v424, %v422
        %v471 = vpack.c.b16 %v427, %v425
        %v472 = vpack.c.b16 %v428, %v426
        %v473 = vpack.c.b16 %v431, %v429
        %v474 = vpack.c.b16 %v432, %v430
        %v475 = vpack.c.b16 %v435, %v433
        %v476 = vpack.c.b16 %v436, %v434
        %v477 = vpack.c.b16 %v439, %v437
        %v478 = vpack.c.b16 %v440, %v438
        %v479 = vpack.c.b16 %v443, %v441
        %v480 = vpack.c.b16 %v444, %v442
        %v481 = vpack.c.b16 %v447, %v445
        %v482 = vpack.c.b16 %v448, %v446
        %v483 = vpack.c.b16 %v451, %v449
        %v484 = vpack.c.b16 %v452, %v450
        %v485 = vpack.c.b16 %v455, %v453
        %v486 = vpack.c.b16 %v456, %v454
        %v487 = vpack.c.b16 %v459, %v457
        %v488 = vpack.c.b16 %v460, %v458
        %v489 = vpack.c.b16 %v463, %v461
        %v490 = vpack.c.b16 %v464, %v462
        %v491 = vpack.c.b16 %v467, %v465
        %v492 = vpack.c.b16 %v468, %v466
        %vm517 = vcmask 523264
        %v519 = vsel %vm517, %v392, 0
        %v522 = vsel %vm517, %v394, 0
        %524 = vmatprep.subr.bf16.mxu0 %v470
        %525 = vmatpush1.bf16.msra.mxu0 %v469
        %526 = vmatprep.subr.bf16.mxu0 %v472
        %527 = vmatpush1.bf16.msra.mxu0 %v471
        %528 = vmatprep.subr.bf16.mxu0 %v474
        %529 = vmatpush1.bf16.msra.mxu0 %v473
        %530 = vmatprep.subr.bf16.mxu0 %v476
        %531 = vmatpush1.bf16.msra.mxu0 %v475
        %532 = vmatprep.subr.bf16.mxu0 %v478
        %533 = vmatpush1.bf16.msra.mxu0 %v477
        %534 = vmatprep.subr.bf16.mxu0 %v480
        %535 = vmatpush1.bf16.msra.mxu0 %v479
        %536 = vmatprep.subr.bf16.mxu0 %v482
        %537 = vmatpush1.bf16.msra.mxu0 %v481
        %538 = vmatprep.subr.bf16.mxu0 %v484
        %539 = vmatpush1.bf16.msra.mxu0 %v483
        %540 = vmatprep.subr.bf16.mxu0 %v486
        %541 = vmatpush1.bf16.msra.mxu0 %v485
        %542 = vmatprep.subr.bf16.mxu0 %v488
        %543 = vmatpush1.bf16.msra.mxu0 %v487
        %544 = vmatprep.subr.bf16.mxu0 %v490
        %545 = vmatpush1.bf16.msra.mxu0 %v489
        %546 = vmatprep.subr.bf16.mxu0 %v492
        %547 = vmatpush1.bf16.msra.mxu0 %v491
        %548 = vmatprep.subr.bf16.mxu0 0
        %549 = vmatpush1.bf16.msra.mxu0 0
        %550 = vmatprep.subr.bf16.mxu0 0
        %551 = vmatpush1.bf16.msra.mxu0 0
        %552 = vmatprep.subr.bf16.mxu0 0
        %553 = vmatpush1.bf16.msra.mxu0 0
        %554 = vmatprep.subr.bf16.mxu0 0
        %555 = vmatpush1.bf16.msra.mxu0 0
        %556 = vmatprep.mubr.bf16.mxu0 %v519
        %557 = vmatmul.mubr.bf16.gmra.mrb[0].mxu0 %v391
        %v558 = vpop.f32.mrb[0].mxu0
        %v559 = vadd.f32 0.0, %v558
        %v560 = vpop.f32.mrb[0].mxu0
        %v561 = vadd.f32 0.0, %v560
        %v562 = vpop.f32.mrb[0].mxu0
        %v563 = vadd.f32 0.0, %v562
        %v564 = vpop.f32.mrb[0].mxu0
        %v565 = vadd.f32 0.0, %v564
        %566 = vmatprep.mubr.bf16.mxu0 %v522
        %567 = vmatmul.mubr.bf16.gmra.mrb[0].mxu0 %v393
        %v568 = vpop.f32.mrb[0].mxu0
        %v569 = vadd.f32 0.0, %v568
        %v570 = vpop.f32.mrb[0].mxu0
        %v571 = vadd.f32 0.0, %v570
        %v572 = vpop.f32.mrb[0].mxu0
        %v573 = vadd.f32 0.0, %v572
        %v574 = vpop.f32.mrb[0].mxu0
        %v575 = vadd.f32 0.0, %v574
        %576 = vdwg.mxu0
        %v577 = vld [vmem:[#allocation2] sm:$0xf]
        %v578 = vadd.f32 %v559, %v563
        %v579 = vrot.slane %v578, 4
        %v580 = vadd.f32 %v578, %v579
        %v581 = vrot.slane %v580, 2
        %v582 = vadd.f32 %v580, %v581
        %v583 = vrot.slane %v582, 1
        %v584 = vadd.f32 %v582, %v583
        %v585 = vadd.f32 %v561, %v565
        %v586 = vrot.slane %v585, 4
        %v587 = vadd.f32 %v585, %v586
        %v588 = vrot.slane %v587, 2
        %v589 = vadd.f32 %v587, %v588
        %v590 = vrot.slane %v589, 1
        %v591 = vadd.f32 %v589, %v590
        %v592 = vadd.f32 %v569, %v573
        %v593 = vrot.slane %v592, 4
        %v594 = vadd.f32 %v592, %v593
        %v595 = vrot.slane %v594, 2
        %v596 = vadd.f32 %v594, %v595
        %v597 = vrot.slane %v596, 1
        %v598 = vadd.f32 %v596, %v597
        %v599 = vadd.f32 %v571, %v575
        %v600 = vrot.slane %v599, 4
        %v601 = vadd.f32 %v599, %v600
        %v602 = vrot.slane %v601, 2
        %v603 = vadd.f32 %v601, %v602
        %v604 = vrot.slane %v603, 1
        %v605 = vadd.f32 %v603, %v604
        %v610 = vcombine.low %v584, %v591
        %v612 = vunpack.c.l.s4 1983009808
        %v613 = vunpack.c.0.s8 %v612
        %v614 = vlaneseq
        %v615 = vshrl.u32 %v614, 7
        %v616 = vsub.s32 %v613, %v615
        %v617 = vrot.slane %v610, %v616
        %v618 = vcombine.low %v598, %v605
        %v620 = vunpack.c.l.s4 1983009808
        %v621 = vunpack.c.0.s8 %v620
        %v622 = vlaneseq
        %v623 = vshrl.u32 %v622, 7
        %v624 = vsub.s32 %v621, %v623
        %v625 = vrot.slane %v618, %v624
        %vm626 = vcmask 1044484
        %v627 = vsel %vm626, %v617, %v617
        %vm628 = vcmask 1046534
        %v629 = vsel %vm628, %v617, %v627
        %v630 = vrot.slane %v625, 7
        %vm631 = vcmask 1041409
        %v632 = vsel %vm631, %v630, %v629
        %vm633 = vcmask 1043459
        %v634 = vsel %vm633, %v630, %v632
        %vm635 = vcmask 1045509
        %v636 = vsel %vm635, %v630, %v634
        %vm637 = vcmask 1047559
        %v638 = vsel %vm637, %v630, %v636
        %v640 = vadd.f32 %v577, %v638
        %641 = vst [vmem:[#allocation2] sm:$0xf] %v640
        %p642 = scmp.eq.s32.totalorder %s24, 3
        // Predicated region
        $region91: #{clip_classifier_forward.1} parent=81 // pred_check
          %p643 = pneg %p642
        $region92: #{clip_classifier_forward.1} parent=81 // pred_check_branch
          %645 = sbr.rel (%p643) target = $region94
        $region93: #{clip_classifier_forward.1} parent=81 // pred_region
          %v646 = vld [vmem:[#allocation2] sm:$0xf]
          %v647 = vmul.f32 %v646, 0.015625
          %v648 = vld [vmem:[%s2] sm:$0x3]
          %v650 = vlaneseq
          %v651 = vshrl.u32 %v650, 7
          %v652 = vsub.s32 0, %v651
          %v653 = vrot.slane %v648, %v652
          %v654 = vlaneseq
          %v655 = vshrl.u32 %v654, 7
          %v656 = vsub.s32 1, %v655
          %v657 = vrot.slane %v648, %v656
          %v658 = vcombine.low %v653, %v657
          %v660 = vunpack.c.l.s4 1983009808
          %v661 = vunpack.c.0.s8 %v660
          %v662 = vlaneseq
          %v663 = vshrl.u32 %v662, 7
          %v664 = vsub.s32 %v661, %v663
          %v665 = vrot.slane %v658, %v664
          %v667 = vadd.f32 %v647, %v665
          %v670 = vunpack.c.l.s4 1983009808
          %v671 = vunpack.c.0.s8 %v670
          %v672 = vlaneseq
          %v673 = vshrl.u32 %v672, 7
          %v674 = vsub.s32 %v671, %v673
          %v675 = vrot.slane %v667, %v674
          %v676 = vcombine.high %v675, %v675
          %v679 = vpack.c.bf16 %v675, %v675
          %v680 = vpack.c.bf16 %v676, %v676
          %v681 = vld [vmem:[%s3] sm:$0xff]
          %v682 = vld [vmem:[%s3 + $0x8] sm:$0xff]
          %v683 = vld [vmem:[%s3 + $0x10] sm:$0xff]
          %v684 = vld [vmem:[%s3 + $0x18] sm:$0xff]
          %v685 = vld [vmem:[%s3 + $0x20] sm:$0xff]
          %v686 = vld [vmem:[%s3 + $0x28] sm:$0xff]
          %v687 = vld [vmem:[%s3 + $0x30] sm:$0xff]
          %v688 = vld [vmem:[%s3 + $0x38] sm:$0xff]
          %v689 = vld [vmem:[%s3 + $0x40] sm:$0xff]
          %v690 = vld [vmem:[%s3 + $0x48] sm:$0xff]
          %v691 = vld [vmem:[%s3 + $0x50] sm:$0xff]
          %v692 = vld [vmem:[%s3 + $0x58] sm:$0xff]
          %v693 = vld [vmem:[%s3 + $0x60] sm:$0xff]
          %v694 = vld [vmem:[%s3 + $0x68] sm:$0xff]
          %v695 = vld [vmem:[%s3 + $0x70] sm:$0xff]
          %v696 = vld [vmem:[%s3 + $0x78] sm:$0xff]
          %v697 = vld [vmem:[%s3 + $0x80] sm:$0xff]
          %v698 = vld [vmem:[%s3 + $0x88] sm:$0xff]
          %v699 = vld [vmem:[%s3 + $0x90] sm:$0xff]
          %v700 = vld [vmem:[%s3 + $0x98] sm:$0xff]
          %v701 = vld [vmem:[%s3 + $0xa0] sm:$0xff]
          %v702 = vld [vmem:[%s3 + $0xa8] sm:$0xff]
          %v703 = vld [vmem:[%s3 + $0xb0] sm:$0xff]
          %v704 = vld [vmem:[%s3 + $0xb8] sm:$0xff]
          %v705 = vld [vmem:[%s3 + $0xc0] sm:$0xff]
          %v706 = vld [vmem:[%s3 + $0xc8] sm:$0xff]
          %v707 = vld [vmem:[%s3 + $0xd0] sm:$0xff]
          %v708 = vld [vmem:[%s3 + $0xd8] sm:$0xff]
          %v709 = vld [vmem:[%s3 + $0xe0] sm:$0xff]
          %v710 = vld [vmem:[%s3 + $0xe8] sm:$0xff]
          %v711 = vld [vmem:[%s3 + $0xf0] sm:$0xff]
          %v712 = vld [vmem:[%s3 + $0xf8] sm:$0xff]
          %v713 = vld [vmem:[%s3 + $0x100] sm:$0xff]
          %v714 = vld [vmem:[%s3 + $0x108] sm:$0xff]
          %v715 = vld [vmem:[%s3 + $0x110] sm:$0xff]
          %v716 = vld [vmem:[%s3 + $0x118] sm:$0xff]
          %v717 = vld [vmem:[%s3 + $0x120] sm:$0xff]
          %v718 = vld [vmem:[%s3 + $0x128] sm:$0xff]
          %v719 = vld [vmem:[%s3 + $0x130] sm:$0xff]
          %v720 = vld [vmem:[%s3 + $0x138] sm:$0xff]
          %v721 = vld [vmem:[%s3 + $0x140] sm:$0xff]
          %v722 = vld [vmem:[%s3 + $0x148] sm:$0xff]
          %v723 = vld [vmem:[%s3 + $0x150] sm:$0xff]
          %v724 = vld [vmem:[%s3 + $0x158] sm:$0xff]
          %v725 = vld [vmem:[%s3 + $0x160] sm:$0xff]
          %v726 = vld [vmem:[%s3 + $0x168] sm:$0xff]
          %v727 = vld [vmem:[%s3 + $0x170] sm:$0xff]
          %v728 = vld [vmem:[%s3 + $0x178] sm:$0xff]
          %v729 = vld [vmem:[%s3 + $0x180] sm:$0xff]
          %v730 = vld [vmem:[%s3 + $0x188] sm:$0xff]
          %v731 = vld [vmem:[%s3 + $0x190] sm:$0xff]
          %v732 = vld [vmem:[%s3 + $0x198] sm:$0xff]
          %v733 = vld [vmem:[%s3 + $0x1a0] sm:$0xff]
          %v734 = vld [vmem:[%s3 + $0x1a8] sm:$0xff]
          %v735 = vld [vmem:[%s3 + $0x1b0] sm:$0xff]
          %v736 = vld [vmem:[%s3 + $0x1b8] sm:$0xff]
          %v737 = vld [vmem:[%s3 + $0x1c0] sm:$0xff]
          %v738 = vld [vmem:[%s3 + $0x1c8] sm:$0xff]
          %v739 = vld [vmem:[%s3 + $0x1d0] sm:$0xff]
          %v740 = vld [vmem:[%s3 + $0x1d8] sm:$0xff]
          %v741 = vld [vmem:[%s3 + $0x1e0] sm:$0xff]
          %v742 = vld [vmem:[%s3 + $0x1e8] sm:$0xff]
          %v743 = vld [vmem:[%s3 + $0x1f0] sm:$0xff]
          %v744 = vld [vmem:[%s3 + $0x1f8] sm:$0xff]
          %v745 = vld [vmem:[%s3 + $0x200] sm:$0xff]
          %v746 = vld [vmem:[%s3 + $0x208] sm:$0xff]
          %v747 = vld [vmem:[%s3 + $0x210] sm:$0xff]
          %v748 = vld [vmem:[%s3 + $0x218] sm:$0xff]
          %v749 = vld [vmem:[%s3 + $0x220] sm:$0xff]
          %v750 = vld [vmem:[%s3 + $0x228] sm:$0xff]
          %v751 = vld [vmem:[%s3 + $0x230] sm:$0xff]
          %v752 = vld [vmem:[%s3 + $0x238] sm:$0xff]
          %v753 = vld [vmem:[%s3 + $0x240] sm:$0xff]
          %v754 = vld [vmem:[%s3 + $0x248] sm:$0xff]
          %v755 = vld [vmem:[%s3 + $0x250] sm:$0xff]
          %v756 = vld [vmem:[%s3 + $0x258] sm:$0xff]
          %v757 = vld [vmem:[%s3 + $0x260] sm:$0xff]
          %v758 = vld [vmem:[%s3 + $0x268] sm:$0xff]
          %v759 = vld [vmem:[%s3 + $0x270] sm:$0xff]
          %v760 = vld [vmem:[%s3 + $0x278] sm:$0xff]
          %v761 = vld [vmem:[%s3 + $0x280] sm:$0xff]
          %v762 = vld [vmem:[%s3 + $0x288] sm:$0xff]
          %v763 = vld [vmem:[%s3 + $0x290] sm:$0xff]
          %v764 = vld [vmem:[%s3 + $0x298] sm:$0xff]
          %v765 = vld [vmem:[%s3 + $0x2a0] sm:$0xff]
          %v766 = vld [vmem:[%s3 + $0x2a8] sm:$0xff]
          %v767 = vld [vmem:[%s3 + $0x2b0] sm:$0xff]
          %v768 = vld [vmem:[%s3 + $0x2b8] sm:$0xff]
          %v769 = vld [vmem:[%s3 + $0x2c0] sm:$0xff]
          %v770 = vld [vmem:[%s3 + $0x2c8] sm:$0xff]
          %v771 = vld [vmem:[%s3 + $0x2d0] sm:$0xff]
          %v772 = vld [vmem:[%s3 + $0x2d8] sm:$0xff]
          %v773 = vld [vmem:[%s3 + $0x2e0] sm:$0xff]
          %v774 = vld [vmem:[%s3 + $0x2e8] sm:$0xff]
          %v775 = vld [vmem:[%s3 + $0x2f0] sm:$0xff]
          %v776 = vld [vmem:[%s3 + $0x2f8] sm:$0xff]
          %v777 = vld [vmem:[%s3 + $0x300] sm:$0xff]
          %v778 = vld [vmem:[%s3 + $0x308] sm:$0xff]
          %v779 = vld [vmem:[%s3 + $0x310] sm:$0xff]
          %v780 = vld [vmem:[%s3 + $0x318] sm:$0xff]
          %v781 = vld [vmem:[%s3 + $0x320] sm:$0xff]
          %v782 = vld [vmem:[%s3 + $0x328] sm:$0xff]
          %v783 = vld [vmem:[%s3 + $0x330] sm:$0xff]
          %v784 = vld [vmem:[%s3 + $0x338] sm:$0xff]
          %v785 = vld [vmem:[%s3 + $0x340] sm:$0xff]
          %v786 = vld [vmem:[%s3 + $0x348] sm:$0xff]
          %v787 = vld [vmem:[%s3 + $0x350] sm:$0xff]
          %v788 = vld [vmem:[%s3 + $0x358] sm:$0xff]
          %v789 = vld [vmem:[%s3 + $0x360] sm:$0xff]
          %v790 = vld [vmem:[%s3 + $0x368] sm:$0xff]
          %v791 = vld [vmem:[%s3 + $0x370] sm:$0xff]
          %v792 = vld [vmem:[%s3 + $0x378] sm:$0xff]
          %v793 = vld [vmem:[%s3 + $0x380] sm:$0xff]
          %v794 = vld [vmem:[%s3 + $0x388] sm:$0xff]
          %v795 = vld [vmem:[%s3 + $0x390] sm:$0xff]
          %v796 = vld [vmem:[%s3 + $0x398] sm:$0xff]
          %v797 = vld [vmem:[%s3 + $0x3a0] sm:$0xff]
          %v798 = vld [vmem:[%s3 + $0x3a8] sm:$0xff]
          %v799 = vld [vmem:[%s3 + $0x3b0] sm:$0xff]
          %v800 = vld [vmem:[%s3 + $0x3b8] sm:$0xff]
          %v801 = vld [vmem:[%s3 + $0x3c0] sm:$0xff]
          %v802 = vld [vmem:[%s3 + $0x3c8] sm:$0xff]
          %v803 = vld [vmem:[%s3 + $0x3d0] sm:$0xff]
          %v804 = vld [vmem:[%s3 + $0x3d8] sm:$0xff]
          %v805 = vld [vmem:[%s3 + $0x3e0] sm:$0xff]
          %v806 = vld [vmem:[%s3 + $0x3e8] sm:$0xff]
          %v807 = vld [vmem:[%s3 + $0x3f0] sm:$0xff]
          %v808 = vld [vmem:[%s3 + $0x3f8] sm:$0xff]
          %v809 = vld [vmem:[%s3 + $0x400] sm:$0xff]
          %v810 = vld [vmem:[%s3 + $0x408] sm:$0xff]
          %v811 = vld [vmem:[%s3 + $0x410] sm:$0xff]
          %v812 = vld [vmem:[%s3 + $0x418] sm:$0xff]
          %v813 = vld [vmem:[%s3 + $0x420] sm:$0xff]
          %v814 = vld [vmem:[%s3 + $0x428] sm:$0xff]
          %v815 = vld [vmem:[%s3 + $0x430] sm:$0xff]
          %v816 = vld [vmem:[%s3 + $0x438] sm:$0xff]
          %v817 = vld [vmem:[%s3 + $0x440] sm:$0xff]
          %v818 = vld [vmem:[%s3 + $0x448] sm:$0xff]
          %v819 = vld [vmem:[%s3 + $0x450] sm:$0xff]
          %v820 = vld [vmem:[%s3 + $0x458] sm:$0xff]
          %v821 = vld [vmem:[%s3 + $0x460] sm:$0xff]
          %v822 = vld [vmem:[%s3 + $0x468] sm:$0xff]
          %v823 = vld [vmem:[%s3 + $0x470] sm:$0xff]
          %v824 = vld [vmem:[%s3 + $0x478] sm:$0xff]
          %v825 = vld [vmem:[%s3 + $0x480] sm:$0xff]
          %v826 = vld [vmem:[%s3 + $0x488] sm:$0xff]
          %v827 = vld [vmem:[%s3 + $0x490] sm:$0xff]
          %v828 = vld [vmem:[%s3 + $0x498] sm:$0xff]
          %v829 = vld [vmem:[%s3 + $0x4a0] sm:$0xff]
          %v830 = vld [vmem:[%s3 + $0x4a8] sm:$0xff]
          %v831 = vld [vmem:[%s3 + $0x4b0] sm:$0xff]
          %v832 = vld [vmem:[%s3 + $0x4b8] sm:$0xff]
          %v833 = vld [vmem:[%s3 + $0x4c0] sm:$0xff]
          %v834 = vld [vmem:[%s3 + $0x4c8] sm:$0xff]
          %v835 = vld [vmem:[%s3 + $0x4d0] sm:$0xff]
          %v836 = vld [vmem:[%s3 + $0x4d8] sm:$0xff]
          %v837 = vld [vmem:[%s3 + $0x4e0] sm:$0xff]
          %v838 = vld [vmem:[%s3 + $0x4e8] sm:$0xff]
          %v839 = vld [vmem:[%s3 + $0x4f0] sm:$0xff]
          %v840 = vld [vmem:[%s3 + $0x4f8] sm:$0xff]
          %v841 = vld [vmem:[%s4] sm:$0xff]
          %v842 = vld [vmem:[%s4 + $0x8] sm:$0x3]
          %v845 = vlaneseq
          %v846 = vshrl.u32 %v845, 7
          %v847 = vsub.s32 0, %v846
          %v848 = vrot.slane %v841, %v847
          %v849 = vlaneseq
          %v850 = vshrl.u32 %v849, 7
          %v851 = vsub.s32 1, %v850
          %v852 = vrot.slane %v841, %v851
          %v853 = vlaneseq
          %v854 = vshrl.u32 %v853, 7
          %v855 = vsub.s32 2, %v854
          %v856 = vrot.slane %v841, %v855
          %v857 = vlaneseq
          %v858 = vshrl.u32 %v857, 7
          %v859 = vsub.s32 3, %v858
          %v860 = vrot.slane %v841, %v859
          %v861 = vlaneseq
          %v862 = vshrl.u32 %v861, 7
          %v863 = vsub.s32 4, %v862
          %v864 = vrot.slane %v841, %v863
          %v865 = vlaneseq
          %v866 = vshrl.u32 %v865, 7
          %v867 = vsub.s32 5, %v866
          %v868 = vrot.slane %v841, %v867
          %v869 = vlaneseq
          %v870 = vshrl.u32 %v869, 7
          %v871 = vsub.s32 6, %v870
          %v872 = vrot.slane %v841, %v871
          %v873 = vlaneseq
          %v874 = vshrl.u32 %v873, 7
          %v875 = vsub.s32 7, %v874
          %v876 = vrot.slane %v841, %v875
          %v877 = vlaneseq
          %v878 = vshrl.u32 %v877, 7
          %v879 = vsub.s32 0, %v878
          %v880 = vrot.slane %v842, %v879
          %v881 = vlaneseq
          %v882 = vshrl.u32 %v881, 7
          %v883 = vsub.s32 1, %v882
          %v884 = vrot.slane %v842, %v883
          %v1055 = vunpack.c.l.b16 %v681
          %v1056 = vunpack.c.h.b16 %v681
          %v1057 = vunpack.c.l.b16 %v682
          %v1058 = vunpack.c.h.b16 %v682
          %v1059 = vunpack.c.l.b16 %v683
          %v1060 = vunpack.c.h.b16 %v683
          %v1061 = vunpack.c.l.b16 %v684
          %v1062 = vunpack.c.h.b16 %v684
          %v1063 = vunpack.c.l.b16 %v685
          %v1064 = vunpack.c.h.b16 %v685
          %v1065 = vunpack.c.l.b16 %v686
          %v1066 = vunpack.c.h.b16 %v686
          %v1067 = vunpack.c.l.b16 %v687
          %v1068 = vunpack.c.h.b16 %v687
          %v1069 = vunpack.c.l.b16 %v688
          %v1070 = vunpack.c.h.b16 %v688
          %v1071 = vunpack.c.l.b16 %v689
          %v1072 = vunpack.c.h.b16 %v689
          %v1073 = vunpack.c.l.b16 %v690
          %v1074 = vunpack.c.h.b16 %v690
          %v1075 = vunpack.c.l.b16 %v691
          %v1076 = vunpack.c.h.b16 %v691
          %v1077 = vunpack.c.l.b16 %v692
          %v1078 = vunpack.c.h.b16 %v692
          %v1079 = vunpack.c.l.b16 %v693
          %v1080 = vunpack.c.h.b16 %v693
          %v1081 = vunpack.c.l.b16 %v694
          %v1082 = vunpack.c.h.b16 %v694
          %v1083 = vunpack.c.l.b16 %v695
          %v1084 = vunpack.c.h.b16 %v695
          %v1085 = vunpack.c.l.b16 %v696
          %v1086 = vunpack.c.h.b16 %v696
          %v1087 = vunpack.c.l.b16 %v697
          %v1088 = vunpack.c.h.b16 %v697
          %v1089 = vunpack.c.l.b16 %v698
          %v1090 = vunpack.c.h.b16 %v698
          %v1091 = vunpack.c.l.b16 %v699
          %v1092 = vunpack.c.h.b16 %v699
          %v1093 = vunpack.c.l.b16 %v700
          %v1094 = vunpack.c.h.b16 %v700
          %v1095 = vunpack.c.l.b16 %v701
          %v1096 = vunpack.c.h.b16 %v701
          %v1097 = vunpack.c.l.b16 %v702
          %v1098 = vunpack.c.h.b16 %v702
          %v1099 = vunpack.c.l.b16 %v703
          %v1100 = vunpack.c.h.b16 %v703
          %v1101 = vunpack.c.l.b16 %v704
          %v1102 = vunpack.c.h.b16 %v704
          %v1103 = vunpack.c.l.b16 %v705
          %v1104 = vunpack.c.h.b16 %v705
          %v1105 = vunpack.c.l.b16 %v706
          %v1106 = vunpack.c.h.b16 %v706
          %v1107 = vunpack.c.l.b16 %v707
          %v1108 = vunpack.c.h.b16 %v707
          %v1109 = vunpack.c.l.b16 %v708
          %v1110 = vunpack.c.h.b16 %v708
          %v1111 = vunpack.c.l.b16 %v709
          %v1112 = vunpack.c.h.b16 %v709
          %v1113 = vunpack.c.l.b16 %v710
          %v1114 = vunpack.c.h.b16 %v710
          %v1115 = vunpack.c.l.b16 %v711
          %v1116 = vunpack.c.h.b16 %v711
          %v1117 = vunpack.c.l.b16 %v712
          %v1118 = vunpack.c.h.b16 %v712
          %v1119 = vunpack.c.l.b16 %v713
          %v1120 = vunpack.c.h.b16 %v713
          %v1121 = vunpack.c.l.b16 %v714
          %v1122 = vunpack.c.h.b16 %v714
          %v1123 = vunpack.c.l.b16 %v715
          %v1124 = vunpack.c.h.b16 %v715
          %v1125 = vunpack.c.l.b16 %v716
          %v1126 = vunpack.c.h.b16 %v716
          %v1127 = vunpack.c.l.b16 %v717
          %v1128 = vunpack.c.h.b16 %v717
          %v1129 = vunpack.c.l.b16 %v718
          %v1130 = vunpack.c.h.b16 %v718
          %v1131 = vunpack.c.l.b16 %v719
          %v1132 = vunpack.c.h.b16 %v719
          %v1133 = vunpack.c.l.b16 %v720
          %v1134 = vunpack.c.h.b16 %v720
          %v1135 = vunpack.c.l.b16 %v721
          %v1136 = vunpack.c.h.b16 %v721
          %v1137 = vunpack.c.l.b16 %v722
          %v1138 = vunpack.c.h.b16 %v722
          %v1139 = vunpack.c.l.b16 %v723
          %v1140 = vunpack.c.h.b16 %v723
          %v1141 = vunpack.c.l.b16 %v724
          %v1142 = vunpack.c.h.b16 %v724
          %v1143 = vunpack.c.l.b16 %v725
          %v1144 = vunpack.c.h.b16 %v725
          %v1145 = vunpack.c.l.b16 %v726
          %v1146 = vunpack.c.h.b16 %v726
          %v1147 = vunpack.c.l.b16 %v727
          %v1148 = vunpack.c.h.b16 %v727
          %v1149 = vunpack.c.l.b16 %v728
          %v1150 = vunpack.c.h.b16 %v728
          %v1151 = vunpack.c.l.b16 %v729
          %v1152 = vunpack.c.h.b16 %v729
          %v1153 = vunpack.c.l.b16 %v730
          %v1154 = vunpack.c.h.b16 %v730
          %v1155 = vunpack.c.l.b16 %v731
          %v1156 = vunpack.c.h.b16 %v731
          %v1157 = vunpack.c.l.b16 %v732
          %v1158 = vunpack.c.h.b16 %v732
          %v1159 = vunpack.c.l.b16 %v733
          %v1160 = vunpack.c.h.b16 %v733
          %v1161 = vunpack.c.l.b16 %v734
          %v1162 = vunpack.c.h.b16 %v734
          %v1163 = vunpack.c.l.b16 %v735
          %v1164 = vunpack.c.h.b16 %v735
          %v1165 = vunpack.c.l.b16 %v736
          %v1166 = vunpack.c.h.b16 %v736
          %v1167 = vunpack.c.l.b16 %v737
          %v1168 = vunpack.c.h.b16 %v737
          %v1169 = vunpack.c.l.b16 %v738
          %v1170 = vunpack.c.h.b16 %v738
          %v1171 = vunpack.c.l.b16 %v739
          %v1172 = vunpack.c.h.b16 %v739
          %v1173 = vunpack.c.l.b16 %v740
          %v1174 = vunpack.c.h.b16 %v740
          %v1175 = vunpack.c.l.b16 %v741
          %v1176 = vunpack.c.h.b16 %v741
          %v1177 = vunpack.c.l.b16 %v742
          %v1178 = vunpack.c.h.b16 %v742
          %v1179 = vunpack.c.l.b16 %v743
          %v1180 = vunpack.c.h.b16 %v743
          %v1181 = vunpack.c.l.b16 %v744
          %v1182 = vunpack.c.h.b16 %v744
          %v1183 = vunpack.c.l.b16 %v745
          %v1184 = vunpack.c.h.b16 %v745
          %v1185 = vunpack.c.l.b16 %v746
          %v1186 = vunpack.c.h.b16 %v746
          %v1187 = vunpack.c.l.b16 %v747
          %v1188 = vunpack.c.h.b16 %v747
          %v1189 = vunpack.c.l.b16 %v748
          %v1190 = vunpack.c.h.b16 %v748
          %v1191 = vunpack.c.l.b16 %v749
          %v1192 = vunpack.c.h.b16 %v749
          %v1193 = vunpack.c.l.b16 %v750
          %v1194 = vunpack.c.h.b16 %v750
          %v1195 = vunpack.c.l.b16 %v751
          %v1196 = vunpack.c.h.b16 %v751
          %v1197 = vunpack.c.l.b16 %v752
          %v1198 = vunpack.c.h.b16 %v752
          %v1199 = vunpack.c.l.b16 %v753
          %v1200 = vunpack.c.h.b16 %v753
          %v1201 = vunpack.c.l.b16 %v754
          %v1202 = vunpack.c.h.b16 %v754
          %v1203 = vunpack.c.l.b16 %v755
          %v1204 = vunpack.c.h.b16 %v755
          %v1205 = vunpack.c.l.b16 %v756
          %v1206 = vunpack.c.h.b16 %v756
          %v1207 = vunpack.c.l.b16 %v757
          %v1208 = vunpack.c.h.b16 %v757
          %v1209 = vunpack.c.l.b16 %v758
          %v1210 = vunpack.c.h.b16 %v758
          %v1211 = vunpack.c.l.b16 %v759
          %v1212 = vunpack.c.h.b16 %v759
          %v1213 = vunpack.c.l.b16 %v760
          %v1214 = vunpack.c.h.b16 %v760
          %v1215 = vunpack.c.l.b16 %v761
          %v1216 = vunpack.c.h.b16 %v761
          %v1217 = vunpack.c.l.b16 %v762
          %v1218 = vunpack.c.h.b16 %v762
          %v1219 = vunpack.c.l.b16 %v763
          %v1220 = vunpack.c.h.b16 %v763
          %v1221 = vunpack.c.l.b16 %v764
          %v1222 = vunpack.c.h.b16 %v764
          %v1223 = vunpack.c.l.b16 %v765
          %v1224 = vunpack.c.h.b16 %v765
          %v1225 = vunpack.c.l.b16 %v766
          %v1226 = vunpack.c.h.b16 %v766
          %v1227 = vunpack.c.l.b16 %v767
          %v1228 = vunpack.c.h.b16 %v767
          %v1229 = vunpack.c.l.b16 %v768
          %v1230 = vunpack.c.h.b16 %v768
          %v1231 = vunpack.c.l.b16 %v769
          %v1232 = vunpack.c.h.b16 %v769
          %v1233 = vunpack.c.l.b16 %v770
          %v1234 = vunpack.c.h.b16 %v770
          %v1235 = vunpack.c.l.b16 %v771
          %v1236 = vunpack.c.h.b16 %v771
          %v1237 = vunpack.c.l.b16 %v772
          %v1238 = vunpack.c.h.b16 %v772
          %v1239 = vunpack.c.l.b16 %v773
          %v1240 = vunpack.c.h.b16 %v773
          %v1241 = vunpack.c.l.b16 %v774
          %v1242 = vunpack.c.h.b16 %v774
          %v1243 = vunpack.c.l.b16 %v775
          %v1244 = vunpack.c.h.b16 %v775
          %v1245 = vunpack.c.l.b16 %v776
          %v1246 = vunpack.c.h.b16 %v776
          %v1247 = vunpack.c.l.b16 %v777
          %v1248 = vunpack.c.h.b16 %v777
          %v1249 = vunpack.c.l.b16 %v778
          %v1250 = vunpack.c.h.b16 %v778
          %v1251 = vunpack.c.l.b16 %v779
          %v1252 = vunpack.c.h.b16 %v779
          %v1253 = vunpack.c.l.b16 %v780
          %v1254 = vunpack.c.h.b16 %v780
          %v1255 = vunpack.c.l.b16 %v781
          %v1256 = vunpack.c.h.b16 %v781
          %v1257 = vunpack.c.l.b16 %v782
          %v1258 = vunpack.c.h.b16 %v782
          %v1259 = vunpack.c.l.b16 %v783
          %v1260 = vunpack.c.h.b16 %v783
          %v1261 = vunpack.c.l.b16 %v784
          %v1262 = vunpack.c.h.b16 %v784
          %v1263 = vunpack.c.l.b16 %v785
          %v1264 = vunpack.c.h.b16 %v785
          %v1265 = vunpack.c.l.b16 %v786
          %v1266 = vunpack.c.h.b16 %v786
          %v1267 = vunpack.c.l.b16 %v787
          %v1268 = vunpack.c.h.b16 %v787
          %v1269 = vunpack.c.l.b16 %v788
          %v1270 = vunpack.c.h.b16 %v788
          %v1271 = vunpack.c.l.b16 %v789
          %v1272 = vunpack.c.h.b16 %v789
          %v1273 = vunpack.c.l.b16 %v790
          %v1274 = vunpack.c.h.b16 %v790
          %v1275 = vunpack.c.l.b16 %v791
          %v1276 = vunpack.c.h.b16 %v791
          %v1277 = vunpack.c.l.b16 %v792
          %v1278 = vunpack.c.h.b16 %v792
          %v1279 = vunpack.c.l.b16 %v793
          %v1280 = vunpack.c.h.b16 %v793
          %v1281 = vunpack.c.l.b16 %v794
          %v1282 = vunpack.c.h.b16 %v794
          %v1283 = vunpack.c.l.b16 %v795
          %v1284 = vunpack.c.h.b16 %v795
          %v1285 = vunpack.c.l.b16 %v796
          %v1286 = vunpack.c.h.b16 %v796
          %v1287 = vunpack.c.l.b16 %v797
          %v1288 = vunpack.c.h.b16 %v797
          %v1289 = vunpack.c.l.b16 %v798
          %v1290 = vunpack.c.h.b16 %v798
          %v1291 = vunpack.c.l.b16 %v799
          %v1292 = vunpack.c.h.b16 %v799
          %v1293 = vunpack.c.l.b16 %v800
          %v1294 = vunpack.c.h.b16 %v800
          %v1295 = vunpack.c.l.b16 %v801
          %v1296 = vunpack.c.h.b16 %v801
          %v1297 = vunpack.c.l.b16 %v802
          %v1298 = vunpack.c.h.b16 %v802
          %v1299 = vunpack.c.l.b16 %v803
          %v1300 = vunpack.c.h.b16 %v803
          %v1301 = vunpack.c.l.b16 %v804
          %v1302 = vunpack.c.h.b16 %v804
          %v1303 = vunpack.c.l.b16 %v805
          %v1304 = vunpack.c.h.b16 %v805
          %v1305 = vunpack.c.l.b16 %v806
          %v1306 = vunpack.c.h.b16 %v806
          %v1307 = vunpack.c.l.b16 %v807
          %v1308 = vunpack.c.h.b16 %v807
          %v1309 = vunpack.c.l.b16 %v808
          %v1310 = vunpack.c.h.b16 %v808
          %v1311 = vunpack.c.l.b16 %v809
          %v1312 = vunpack.c.h.b16 %v809
          %v1313 = vunpack.c.l.b16 %v810
          %v1314 = vunpack.c.h.b16 %v810
          %v1315 = vunpack.c.l.b16 %v811
          %v1316 = vunpack.c.h.b16 %v811
          %v1317 = vunpack.c.l.b16 %v812
          %v1318 = vunpack.c.h.b16 %v812
          %v1319 = vunpack.c.l.b16 %v813
          %v1320 = vunpack.c.h.b16 %v813
          %v1321 = vunpack.c.l.b16 %v814
          %v1322 = vunpack.c.h.b16 %v814
          %v1323 = vunpack.c.l.b16 %v815
          %v1324 = vunpack.c.h.b16 %v815
          %v1325 = vunpack.c.l.b16 %v816
          %v1326 = vunpack.c.h.b16 %v816
          %v1327 = vunpack.c.l.b16 %v817
          %v1328 = vunpack.c.h.b16 %v817
          %v1329 = vunpack.c.l.b16 %v818
          %v1330 = vunpack.c.h.b16 %v818
          %v1331 = vunpack.c.l.b16 %v819
          %v1332 = vunpack.c.h.b16 %v819
          %v1333 = vunpack.c.l.b16 %v820
          %v1334 = vunpack.c.h.b16 %v820
          %v1335 = vunpack.c.l.b16 %v821
          %v1336 = vunpack.c.h.b16 %v821
          %v1337 = vunpack.c.l.b16 %v822
          %v1338 = vunpack.c.h.b16 %v822
          %v1339 = vunpack.c.l.b16 %v823
          %v1340 = vunpack.c.h.b16 %v823
          %v1341 = vunpack.c.l.b16 %v824
          %v1342 = vunpack.c.h.b16 %v824
          %v1343 = vunpack.c.l.b16 %v825
          %v1344 = vunpack.c.h.b16 %v825
          %v1345 = vunpack.c.l.b16 %v826
          %v1346 = vunpack.c.h.b16 %v826
          %v1347 = vunpack.c.l.b16 %v827
          %v1348 = vunpack.c.h.b16 %v827
          %v1349 = vunpack.c.l.b16 %v828
          %v1350 = vunpack.c.h.b16 %v828
          %v1351 = vunpack.c.l.b16 %v829
          %v1352 = vunpack.c.h.b16 %v829
          %v1353 = vunpack.c.l.b16 %v830
          %v1354 = vunpack.c.h.b16 %v830
          %v1355 = vunpack.c.l.b16 %v831
          %v1356 = vunpack.c.h.b16 %v831
          %v1357 = vunpack.c.l.b16 %v832
          %v1358 = vunpack.c.h.b16 %v832
          %v1359 = vunpack.c.l.b16 %v833
          %v1360 = vunpack.c.h.b16 %v833
          %v1361 = vunpack.c.l.b16 %v834
          %v1362 = vunpack.c.h.b16 %v834
          %v1363 = vunpack.c.l.b16 %v835
          %v1364 = vunpack.c.h.b16 %v835
          %v1365 = vunpack.c.l.b16 %v836
          %v1366 = vunpack.c.h.b16 %v836
          %v1367 = vunpack.c.l.b16 %v837
          %v1368 = vunpack.c.h.b16 %v837
          %v1369 = vunpack.c.l.b16 %v838
          %v1370 = vunpack.c.h.b16 %v838
          %v1371 = vunpack.c.l.b16 %v839
          %v1372 = vunpack.c.h.b16 %v839
          %v1373 = vunpack.c.l.b16 %v840
          %v1374 = vunpack.c.h.b16 %v840
          %v1375 = vpack.c.b16 %v1065, %v1055
          %v1376 = vpack.c.b16 %v1066, %v1056
          %v1377 = vpack.c.b16 %v1067, %v1057
          %v1378 = vpack.c.b16 %v1068, %v1058
          %v1379 = vpack.c.b16 %v1069, %v1059
          %v1380 = vpack.c.b16 %v1070, %v1060
          %v1381 = vpack.c.b16 %v1071, %v1061
          %v1382 = vpack.c.b16 %v1072, %v1062
          %v1383 = vpack.c.b16 %v1073, %v1063
          %v1384 = vpack.c.b16 %v1074, %v1064
          %v1385 = vpack.c.b16 %v1085, %v1075
          %v1386 = vpack.c.b16 %v1086, %v1076
          %v1387 = vpack.c.b16 %v1087, %v1077
          %v1388 = vpack.c.b16 %v1088, %v1078
          %v1389 = vpack.c.b16 %v1089, %v1079
          %v1390 = vpack.c.b16 %v1090, %v1080
          %v1391 = vpack.c.b16 %v1091, %v1081
          %v1392 = vpack.c.b16 %v1092, %v1082
          %v1393 = vpack.c.b16 %v1093, %v1083
          %v1394 = vpack.c.b16 %v1094, %v1084
          %v1395 = vpack.c.b16 %v1105, %v1095
          %v1396 = vpack.c.b16 %v1106, %v1096
          %v1397 = vpack.c.b16 %v1107, %v1097
          %v1398 = vpack.c.b16 %v1108, %v1098
          %v1399 = vpack.c.b16 %v1109, %v1099
          %v1400 = vpack.c.b16 %v1110, %v1100
          %v1401 = vpack.c.b16 %v1111, %v1101
          %v1402 = vpack.c.b16 %v1112, %v1102
          %v1403 = vpack.c.b16 %v1113, %v1103
          %v1404 = vpack.c.b16 %v1114, %v1104
          %v1405 = vpack.c.b16 %v1125, %v1115
          %v1406 = vpack.c.b16 %v1126, %v1116
          %v1407 = vpack.c.b16 %v1127, %v1117
          %v1408 = vpack.c.b16 %v1128, %v1118
          %v1409 = vpack.c.b16 %v1129, %v1119
          %v1410 = vpack.c.b16 %v1130, %v1120
          %v1411 = vpack.c.b16 %v1131, %v1121
          %v1412 = vpack.c.b16 %v1132, %v1122
          %v1413 = vpack.c.b16 %v1133, %v1123
          %v1414 = vpack.c.b16 %v1134, %v1124
          %v1415 = vpack.c.b16 %v1145, %v1135
          %v1416 = vpack.c.b16 %v1146, %v1136
          %v1417 = vpack.c.b16 %v1147, %v1137
          %v1418 = vpack.c.b16 %v1148, %v1138
          %v1419 = vpack.c.b16 %v1149, %v1139
          %v1420 = vpack.c.b16 %v1150, %v1140
          %v1421 = vpack.c.b16 %v1151, %v1141
          %v1422 = vpack.c.b16 %v1152, %v1142
          %v1423 = vpack.c.b16 %v1153, %v1143
          %v1424 = vpack.c.b16 %v1154, %v1144
          %v1425 = vpack.c.b16 %v1165, %v1155
          %v1426 = vpack.c.b16 %v1166, %v1156
          %v1427 = vpack.c.b16 %v1167, %v1157
          %v1428 = vpack.c.b16 %v1168, %v1158
          %v1429 = vpack.c.b16 %v1169, %v1159
          %v1430 = vpack.c.b16 %v1170, %v1160
          %v1431 = vpack.c.b16 %v1171, %v1161
          %v1432 = vpack.c.b16 %v1172, %v1162
          %v1433 = vpack.c.b16 %v1173, %v1163
          %v1434 = vpack.c.b16 %v1174, %v1164
          %v1435 = vpack.c.b16 %v1185, %v1175
          %v1436 = vpack.c.b16 %v1186, %v1176
          %v1437 = vpack.c.b16 %v1187, %v1177
          %v1438 = vpack.c.b16 %v1188, %v1178
          %v1439 = vpack.c.b16 %v1189, %v1179
          %v1440 = vpack.c.b16 %v1190, %v1180
          %v1441 = vpack.c.b16 %v1191, %v1181
          %v1442 = vpack.c.b16 %v1192, %v1182
          %v1443 = vpack.c.b16 %v1193, %v1183
          %v1444 = vpack.c.b16 %v1194, %v1184
          %v1445 = vpack.c.b16 %v1205, %v1195
          %v1446 = vpack.c.b16 %v1206, %v1196
          %v1447 = vpack.c.b16 %v1207, %v1197
          %v1448 = vpack.c.b16 %v1208, %v1198
          %v1449 = vpack.c.b16 %v1209, %v1199
          %v1450 = vpack.c.b16 %v1210, %v1200
          %v1451 = vpack.c.b16 %v1211, %v1201
          %v1452 = vpack.c.b16 %v1212, %v1202
          %v1453 = vpack.c.b16 %v1213, %v1203
          %v1454 = vpack.c.b16 %v1214, %v1204
          %v1455 = vpack.c.b16 %v1225, %v1215
          %v1456 = vpack.c.b16 %v1226, %v1216
          %v1457 = vpack.c.b16 %v1227, %v1217
          %v1458 = vpack.c.b16 %v1228, %v1218
          %v1459 = vpack.c.b16 %v1229, %v1219
          %v1460 = vpack.c.b16 %v1230, %v1220
          %v1461 = vpack.c.b16 %v1231, %v1221
          %v1462 = vpack.c.b16 %v1232, %v1222
          %v1463 = vpack.c.b16 %v1233, %v1223
          %v1464 = vpack.c.b16 %v1234, %v1224
          %v1465 = vpack.c.b16 %v1245, %v1235
          %v1466 = vpack.c.b16 %v1246, %v1236
          %v1467 = vpack.c.b16 %v1247, %v1237
          %v1468 = vpack.c.b16 %v1248, %v1238
          %v1469 = vpack.c.b16 %v1249, %v1239
          %v1470 = vpack.c.b16 %v1250, %v1240
          %v1471 = vpack.c.b16 %v1251, %v1241
          %v1472 = vpack.c.b16 %v1252, %v1242
          %v1473 = vpack.c.b16 %v1253, %v1243
          %v1474 = vpack.c.b16 %v1254, %v1244
          %v1475 = vpack.c.b16 %v1265, %v1255
          %v1476 = vpack.c.b16 %v1266, %v1256
          %v1477 = vpack.c.b16 %v1267, %v1257
          %v1478 = vpack.c.b16 %v1268, %v1258
          %v1479 = vpack.c.b16 %v1269, %v1259
          %v1480 = vpack.c.b16 %v1270, %v1260
          %v1481 = vpack.c.b16 %v1271, %v1261
          %v1482 = vpack.c.b16 %v1272, %v1262
          %v1483 = vpack.c.b16 %v1273, %v1263
          %v1484 = vpack.c.b16 %v1274, %v1264
          %v1485 = vpack.c.b16 %v1285, %v1275
          %v1486 = vpack.c.b16 %v1286, %v1276
          %v1487 = vpack.c.b16 %v1287, %v1277
          %v1488 = vpack.c.b16 %v1288, %v1278
          %v1489 = vpack.c.b16 %v1289, %v1279
          %v1490 = vpack.c.b16 %v1290, %v1280
          %v1491 = vpack.c.b16 %v1291, %v1281
          %v1492 = vpack.c.b16 %v1292, %v1282
          %v1493 = vpack.c.b16 %v1293, %v1283
          %v1494 = vpack.c.b16 %v1294, %v1284
          %v1495 = vpack.c.b16 %v1305, %v1295
          %v1496 = vpack.c.b16 %v1306, %v1296
          %v1497 = vpack.c.b16 %v1307, %v1297
          %v1498 = vpack.c.b16 %v1308, %v1298
          %v1499 = vpack.c.b16 %v1309, %v1299
          %v1500 = vpack.c.b16 %v1310, %v1300
          %v1501 = vpack.c.b16 %v1311, %v1301
          %v1502 = vpack.c.b16 %v1312, %v1302
          %v1503 = vpack.c.b16 %v1313, %v1303
          %v1504 = vpack.c.b16 %v1314, %v1304
          %v1505 = vpack.c.b16 %v1325, %v1315
          %v1506 = vpack.c.b16 %v1326, %v1316
          %v1507 = vpack.c.b16 %v1327, %v1317
          %v1508 = vpack.c.b16 %v1328, %v1318
          %v1509 = vpack.c.b16 %v1329, %v1319
          %v1510 = vpack.c.b16 %v1330, %v1320
          %v1511 = vpack.c.b16 %v1331, %v1321
          %v1512 = vpack.c.b16 %v1332, %v1322
          %v1513 = vpack.c.b16 %v1333, %v1323
          %v1514 = vpack.c.b16 %v1334, %v1324
          %v1515 = vpack.c.b16 %v1345, %v1335
          %v1516 = vpack.c.b16 %v1346, %v1336
          %v1517 = vpack.c.b16 %v1347, %v1337
          %v1518 = vpack.c.b16 %v1348, %v1338
          %v1519 = vpack.c.b16 %v1349, %v1339
          %v1520 = vpack.c.b16 %v1350, %v1340
          %v1521 = vpack.c.b16 %v1351, %v1341
          %v1522 = vpack.c.b16 %v1352, %v1342
          %v1523 = vpack.c.b16 %v1353, %v1343
          %v1524 = vpack.c.b16 %v1354, %v1344
          %v1525 = vpack.c.b16 %v1365, %v1355
          %v1526 = vpack.c.b16 %v1366, %v1356
          %v1527 = vpack.c.b16 %v1367, %v1357
          %v1528 = vpack.c.b16 %v1368, %v1358
          %v1529 = vpack.c.b16 %v1369, %v1359
          %v1530 = vpack.c.b16 %v1370, %v1360
          %v1531 = vpack.c.b16 %v1371, %v1361
          %v1532 = vpack.c.b16 %v1372, %v1362
          %v1533 = vpack.c.b16 %v1373, %v1363
          %v1534 = vpack.c.b16 %v1374, %v1364
          %1695 = vmatprep.subr.bf16.mxu0 %v1376
          %1696 = vmatpush1.bf16.msra.mxu0 %v1375
          %1697 = vmatprep.subr.bf16.mxu0 %v1386
          %1698 = vmatpush1.bf16.msra.mxu0 %v1385
          %1699 = vmatprep.subr.bf16.mxu0 %v1396
          %1700 = vmatpush1.bf16.msra.mxu0 %v1395
          %1701 = vmatprep.subr.bf16.mxu0 %v1406
          %1702 = vmatpush1.bf16.msra.mxu0 %v1405
          %1703 = vmatprep.subr.bf16.mxu0 %v1416
          %1704 = vmatpush1.bf16.msra.mxu0 %v1415
          %1705 = vmatprep.subr.bf16.mxu0 %v1426
          %1706 = vmatpush1.bf16.msra.mxu0 %v1425
          %1707 = vmatprep.subr.bf16.mxu0 %v1436
          %1708 = vmatpush1.bf16.msra.mxu0 %v1435
          %1709 = vmatprep.subr.bf16.mxu0 %v1446
          %1710 = vmatpush1.bf16.msra.mxu0 %v1445
          %1711 = vmatprep.subr.bf16.mxu0 %v1456
          %1712 = vmatpush1.bf16.msra.mxu0 %v1455
          %1713 = vmatprep.subr.bf16.mxu0 %v1466
          %1714 = vmatpush1.bf16.msra.mxu0 %v1465
          %1715 = vmatprep.subr.bf16.mxu0 %v1476
          %1716 = vmatpush1.bf16.msra.mxu0 %v1475
          %1717 = vmatprep.subr.bf16.mxu0 %v1486
          %1718 = vmatpush1.bf16.msra.mxu0 %v1485
          %1719 = vmatprep.subr.bf16.mxu0 %v1496
          %1720 = vmatpush1.bf16.msra.mxu0 %v1495
          %1721 = vmatprep.subr.bf16.mxu0 %v1506
          %1722 = vmatpush1.bf16.msra.mxu0 %v1505
          %1723 = vmatprep.subr.bf16.mxu0 %v1516
          %1724 = vmatpush1.bf16.msra.mxu0 %v1515
          %1725 = vmatprep.subr.bf16.mxu0 %v1526
          %1726 = vmatpush1.bf16.msra.mxu0 %v1525
          %1727 = vmatprep.mubr.bf16.mxu0 %v680
          %1728 = vmatmul.mubr.bf16.gmra.mrb[0].mxu0 %v679
          %v1729 = vpop.f32.mrb[0].mxu0
          %v1730 = vadd.f32 %v848, %v1729
          %v1731 = vpop.f32.mrb[0].mxu0
          %v1732 = vadd.f32 %v852, %v1731
          %v1733 = vpop.f32.mrb[0].mxu0
          %v1734 = vpop.f32.mrb[0].mxu0
          %1735 = vdwg.mxu0
          %1736 = vmatprep.subr.bf16.mxu0 %v1378
          %1737 = vmatpush1.bf16.msra.mxu0 %v1377
          %1738 = vmatprep.subr.bf16.mxu0 %v1388
          %1739 = vmatpush1.bf16.msra.mxu0 %v1387
          %1740 = vmatprep.subr.bf16.mxu0 %v1398
          %1741 = vmatpush1.bf16.msra.mxu0 %v1397
          %1742 = vmatprep.subr.bf16.mxu0 %v1408
          %1743 = vmatpush1.bf16.msra.mxu0 %v1407
          %1744 = vmatprep.subr.bf16.mxu0 %v1418
          %1745 = vmatpush1.bf16.msra.mxu0 %v1417
          %1746 = vmatprep.subr.bf16.mxu0 %v1428
          %1747 = vmatpush1.bf16.msra.mxu0 %v1427
          %1748 = vmatprep.subr.bf16.mxu0 %v1438
          %1749 = vmatpush1.bf16.msra.mxu0 %v1437
          %1750 = vmatprep.subr.bf16.mxu0 %v1448
          %1751 = vmatpush1.bf16.msra.mxu0 %v1447
          %1752 = vmatprep.subr.bf16.mxu0 %v1458
          %1753 = vmatpush1.bf16.msra.mxu0 %v1457
          %1754 = vmatprep.subr.bf16.mxu0 %v1468
          %1755 = vmatpush1.bf16.msra.mxu0 %v1467
          %1756 = vmatprep.subr.bf16.mxu0 %v1478
          %1757 = vmatpush1.bf16.msra.mxu0 %v1477
          %1758 = vmatprep.subr.bf16.mxu0 %v1488
          %1759 = vmatpush1.bf16.msra.mxu0 %v1487
          %1760 = vmatprep.subr.bf16.mxu0 %v1498
          %1761 = vmatpush1.bf16.msra.mxu0 %v1497
          %1762 = vmatprep.subr.bf16.mxu0 %v1508
          %1763 = vmatpush1.bf16.msra.mxu0 %v1507
          %1764 = vmatprep.subr.bf16.mxu0 %v1518
          %1765 = vmatpush1.bf16.msra.mxu0 %v1517
          %1766 = vmatprep.subr.bf16.mxu0 %v1528
          %1767 = vmatpush1.bf16.msra.mxu0 %v1527
          %1768 = vmatprep.mubr.bf16.mxu0 %v680
          %1769 = vmatmul.mubr.bf16.gmra.mrb[0].mxu0 %v679
          %v1770 = vpop.f32.mrb[0].mxu0
          %v1771 = vadd.f32 %v856, %v1770
          %v1772 = vpop.f32.mrb[0].mxu0
          %v1773 = vadd.f32 %v860, %v1772
          %v1774 = vpop.f32.mrb[0].mxu0
          %v1775 = vpop.f32.mrb[0].mxu0
          %1776 = vdwg.mxu0
          %1777 = vmatprep.subr.bf16.mxu0 %v1380
          %1778 = vmatpush1.bf16.msra.mxu0 %v1379
          %1779 = vmatprep.subr.bf16.mxu0 %v1390
          %1780 = vmatpush1.bf16.msra.mxu0 %v1389
          %1781 = vmatprep.subr.bf16.mxu0 %v1400
          %1782 = vmatpush1.bf16.msra.mxu0 %v1399
          %1783 = vmatprep.subr.bf16.mxu0 %v1410
          %1784 = vmatpush1.bf16.msra.mxu0 %v1409
          %1785 = vmatprep.subr.bf16.mxu0 %v1420
          %1786 = vmatpush1.bf16.msra.mxu0 %v1419
          %1787 = vmatprep.subr.bf16.mxu0 %v1430
          %1788 = vmatpush1.bf16.msra.mxu0 %v1429
          %1789 = vmatprep.subr.bf16.mxu0 %v1440
          %1790 = vmatpush1.bf16.msra.mxu0 %v1439
          %1791 = vmatprep.subr.bf16.mxu0 %v1450
          %1792 = vmatpush1.bf16.msra.mxu0 %v1449
          %1793 = vmatprep.subr.bf16.mxu0 %v1460
          %1794 = vmatpush1.bf16.msra.mxu0 %v1459
          %1795 = vmatprep.subr.bf16.mxu0 %v1470
          %1796 = vmatpush1.bf16.msra.mxu0 %v1469
          %1797 = vmatprep.subr.bf16.mxu0 %v1480
          %1798 = vmatpush1.bf16.msra.mxu0 %v1479
          %1799 = vmatprep.subr.bf16.mxu0 %v1490
          %1800 = vmatpush1.bf16.msra.mxu0 %v1489
          %1801 = vmatprep.subr.bf16.mxu0 %v1500
          %1802 = vmatpush1.bf16.msra.mxu0 %v1499
          %1803 = vmatprep.subr.bf16.mxu0 %v1510
          %1804 = vmatpush1.bf16.msra.mxu0 %v1509
          %1805 = vmatprep.subr.bf16.mxu0 %v1520
          %1806 = vmatpush1.bf16.msra.mxu0 %v1519
          %1807 = vmatprep.subr.bf16.mxu0 %v1530
          %1808 = vmatpush1.bf16.msra.mxu0 %v1529
          %1809 = vmatprep.mubr.bf16.mxu0 %v680
          %1810 = vmatmul.mubr.bf16.gmra.mrb[0].mxu0 %v679
          %v1811 = vpop.f32.mrb[0].mxu0
          %v1812 = vadd.f32 %v864, %v1811
          %v1813 = vpop.f32.mrb[0].mxu0
          %v1814 = vadd.f32 %v868, %v1813
          %v1815 = vpop.f32.mrb[0].mxu0
          %v1816 = vpop.f32.mrb[0].mxu0
          %1817 = vdwg.mxu0
          %1818 = vmatprep.subr.bf16.mxu0 %v1382
          %1819 = vmatpush1.bf16.msra.mxu0 %v1381
          %1820 = vmatprep.subr.bf16.mxu0 %v1392
          %1821 = vmatpush1.bf16.msra.mxu0 %v1391
          %1822 = vmatprep.subr.bf16.mxu0 %v1402
          %1823 = vmatpush1.bf16.msra.mxu0 %v1401
          %1824 = vmatprep.subr.bf16.mxu0 %v1412
          %1825 = vmatpush1.bf16.msra.mxu0 %v1411
          %1826 = vmatprep.subr.bf16.mxu0 %v1422
          %1827 = vmatpush1.bf16.msra.mxu0 %v1421
          %1828 = vmatprep.subr.bf16.mxu0 %v1432
          %1829 = vmatpush1.bf16.msra.mxu0 %v1431
          %1830 = vmatprep.subr.bf16.mxu0 %v1442
          %1831 = vmatpush1.bf16.msra.mxu0 %v1441
          %1832 = vmatprep.subr.bf16.mxu0 %v1452
          %1833 = vmatpush1.bf16.msra.mxu0 %v1451
          %1834 = vmatprep.subr.bf16.mxu0 %v1462
          %1835 = vmatpush1.bf16.msra.mxu0 %v1461
          %1836 = vmatprep.subr.bf16.mxu0 %v1472
          %1837 = vmatpush1.bf16.msra.mxu0 %v1471
          %1838 = vmatprep.subr.bf16.mxu0 %v1482
          %1839 = vmatpush1.bf16.msra.mxu0 %v1481
          %1840 = vmatprep.subr.bf16.mxu0 %v1492
          %1841 = vmatpush1.bf16.msra.mxu0 %v1491
          %1842 = vmatprep.subr.bf16.mxu0 %v1502
          %1843 = vmatpush1.bf16.msra.mxu0 %v1501
          %1844 = vmatprep.subr.bf16.mxu0 %v1512
          %1845 = vmatpush1.bf16.msra.mxu0 %v1511
          %1846 = vmatprep.subr.bf16.mxu0 %v1522
          %1847 = vmatpush1.bf16.msra.mxu0 %v1521
          %1848 = vmatprep.subr.bf16.mxu0 %v1532
          %1849 = vmatpush1.bf16.msra.mxu0 %v1531
          %1850 = vmatprep.mubr.bf16.mxu0 %v680
          %1851 = vmatmul.mubr.bf16.gmra.mrb[0].mxu0 %v679
          %v1852 = vpop.f32.mrb[0].mxu0
          %v1853 = vadd.f32 %v872, %v1852
          %v1854 = vpop.f32.mrb[0].mxu0
          %v1855 = vadd.f32 %v876, %v1854
          %v1856 = vpop.f32.mrb[0].mxu0
          %v1857 = vpop.f32.mrb[0].mxu0
          %1858 = vdwg.mxu0
          %1859 = vmatprep.subr.bf16.mxu0 %v1384
          %1860 = vmatpush1.bf16.msra.mxu0 %v1383
          %1861 = vmatprep.subr.bf16.mxu0 %v1394
          %1862 = vmatpush1.bf16.msra.mxu0 %v1393
          %1863 = vmatprep.subr.bf16.mxu0 %v1404
          %1864 = vmatpush1.bf16.msra.mxu0 %v1403
          %1865 = vmatprep.subr.bf16.mxu0 %v1414
          %1866 = vmatpush1.bf16.msra.mxu0 %v1413
          %1867 = vmatprep.subr.bf16.mxu0 %v1424
          %1868 = vmatpush1.bf16.msra.mxu0 %v1423
          %1869 = vmatprep.subr.bf16.mxu0 %v1434
          %1870 = vmatpush1.bf16.msra.mxu0 %v1433
          %1871 = vmatprep.subr.bf16.mxu0 %v1444
          %1872 = vmatpush1.bf16.msra.mxu0 %v1443
          %1873 = vmatprep.subr.bf16.mxu0 %v1454
          %1874 = vmatpush1.bf16.msra.mxu0 %v1453
          %1875 = vmatprep.subr.bf16.mxu0 %v1464
          %1876 = vmatpush1.bf16.msra.mxu0 %v1463
          %1877 = vmatprep.subr.bf16.mxu0 %v1474
          %1878 = vmatpush1.bf16.msra.mxu0 %v1473
          %1879 = vmatprep.subr.bf16.mxu0 %v1484
          %1880 = vmatpush1.bf16.msra.mxu0 %v1483
          %1881 = vmatprep.subr.bf16.mxu0 %v1494
          %1882 = vmatpush1.bf16.msra.mxu0 %v1493
          %1883 = vmatprep.subr.bf16.mxu0 %v1504
          %1884 = vmatpush1.bf16.msra.mxu0 %v1503
          %1885 = vmatprep.subr.bf16.mxu0 %v1514
          %1886 = vmatpush1.bf16.msra.mxu0 %v1513
          %1887 = vmatprep.subr.bf16.mxu0 %v1524
          %1888 = vmatpush1.bf16.msra.mxu0 %v1523
          %1889 = vmatprep.subr.bf16.mxu0 %v1534
          %1890 = vmatpush1.bf16.msra.mxu0 %v1533
          %1891 = vmatprep.mubr.bf16.mxu0 %v680
          %1892 = vmatmul.mubr.bf16.gmra.mrb[0].mxu0 %v679
          %v1893 = vpop.f32.mrb[0].mxu0
          %v1894 = vadd.f32 %v880, %v1893
          %v1895 = vpop.f32.mrb[0].mxu0
          %v1896 = vadd.f32 %v884, %v1895
          %v1897 = vpop.f32.mrb[0].mxu0
          %v1898 = vpop.f32.mrb[0].mxu0
          %1899 = vdwg.mxu0
          %v1900 = vld [vmem:[%s5] sm:$0xff]
          %v1901 = vld [vmem:[%s5 + $0x8] sm:$0x3]
          %v1904 = vlaneseq
          %v1905 = vshrl.u32 %v1904, 7
          %v1906 = vsub.s32 0, %v1905
          %v1907 = vrot.slane %v1900, %v1906
          %v1908 = vlaneseq
          %v1909 = vshrl.u32 %v1908, 7
          %v1910 = vsub.s32 1, %v1909
          %v1911 = vrot.slane %v1900, %v1910
          %v1912 = vlaneseq
          %v1913 = vshrl.u32 %v1912, 7
          %v1914 = vsub.s32 2, %v1913
          %v1915 = vrot.slane %v1900, %v1914
          %v1916 = vlaneseq
          %v1917 = vshrl.u32 %v1916, 7
          %v1918 = vsub.s32 3, %v1917
          %v1919 = vrot.slane %v1900, %v1918
          %v1920 = vlaneseq
          %v1921 = vshrl.u32 %v1920, 7
          %v1922 = vsub.s32 4, %v1921
          %v1923 = vrot.slane %v1900, %v1922
          %v1924 = vlaneseq
          %v1925 = vshrl.u32 %v1924, 7
          %v1926 = vsub.s32 5, %v1925
          %v1927 = vrot.slane %v1900, %v1926
          %v1928 = vlaneseq
          %v1929 = vshrl.u32 %v1928, 7
          %v1930 = vsub.s32 6, %v1929
          %v1931 = vrot.slane %v1900, %v1930
          %v1932 = vlaneseq
          %v1933 = vshrl.u32 %v1932, 7
          %v1934 = vsub.s32 7, %v1933
          %v1935 = vrot.slane %v1900, %v1934
          %v1936 = vlaneseq
          %v1937 = vshrl.u32 %v1936, 7
          %v1938 = vsub.s32 0, %v1937
          %v1939 = vrot.slane %v1901, %v1938
          %v1940 = vlaneseq
          %v1941 = vshrl.u32 %v1940, 7
          %v1942 = vsub.s32 1, %v1941
          %v1943 = vrot.slane %v1901, %v1942
          %v1954 = vmul.f32 %v1730, %v1907
          %v1955 = vmul.f32 %v1732, %v1911
          %v1956 = vmul.f32 %v1771, %v1915
          %v1957 = vmul.f32 %v1773, %v1919
          %v1958 = vmul.f32 %v1812, %v1923
          %v1959 = vmul.f32 %v1814, %v1927
          %v1960 = vmul.f32 %v1853, %v1931
          %v1961 = vmul.f32 %v1855, %v1935
          %v1962 = vmul.f32 %v1894, %v1939
          %v1963 = vmul.f32 %v1896, %v1943
          %vm1964 = vcmask 1041408
          %v1965 = vsel %vm1964, %v1954, 0.0
          %v1966 = vsel %vm1964, %v1955, 0.0
          %v1967 = vadd.f32 %v1965, %v1966
          %v1968 = vsel %vm1964, %v1956, 0.0
          %v1969 = vadd.f32 %v1967, %v1968
          %v1970 = vsel %vm1964, %v1957, 0.0
          %v1971 = vadd.f32 %v1969, %v1970
          %v1972 = vsel %vm1964, %v1958, 0.0
          %v1973 = vadd.f32 %v1971, %v1972
          %v1974 = vsel %vm1964, %v1959, 0.0
          %v1975 = vadd.f32 %v1973, %v1974
          %v1976 = vsel %vm1964, %v1960, 0.0
          %v1977 = vadd.f32 %v1975, %v1976
          %v1978 = vsel %vm1964, %v1961, 0.0
          %v1979 = vadd.f32 %v1977, %v1978
          %v1980 = vsel %vm1964, %v1962, 0.0
          %v1981 = vadd.f32 %v1979, %v1980
          %v1982 = vsel %vm1964, %v1963, 0.0
          %v1983 = vadd.f32 %v1981, %v1982
          %1984 = vadd.xlane.f32.xlu0 %v1983
          %v1985 = vpop.xlane.xlu0 %1984
          %s1986 = sld [smem:[#allocation3]]
          %v1987 = vstv %s1986
          %v1988 = vadd.f32 %v1985, %v1987
          %vm1989 = vcmask 1024
          %1990 = vst.msk [vmem:[%s344] sm:$0x3] %vm1989, %v1988
        $region94: #{clip_classifier_forward.1} parent=81 // pred_fallthru
          _
        %p1991 = scmp.lt.s32.totalorder %s23, 0
        %s1992 = scalar_select %p1991, %s23, 0
        %s1993 = smul.addr %s1992, 2
        %s1994 = scalar_lea.vmem %s7, %s1993
        // Predicated region
        $region95: #{clip_classifier_forward.1} parent=81 // pred_check
          %p1995 = pneg %p203
        $region96: #{clip_classifier_forward.1} parent=81 // pred_check_branch
          %1997 = sbr.rel (%p1995) target = $region98
        $region97: #{clip_classifier_forward.1} parent=81 // pred_region
          _
        $region98: #{clip_classifier_forward.1} parent=81 // pred_fallthru
          _
        // Predicated region
        $region99: #{clip_classifier_forward.1} parent=81 // pred_check
          %p1998 = pneg %p203
        $region100: #{clip_classifier_forward.1} parent=81 // pred_check_branch
          %2000 = sbr.rel (%p1998) target = $region102
        $region101: #{clip_classifier_forward.1} parent=81 // pred_region
          %p2001 = scmp.lt.s32.totalorder %s23, 0
          %s2002 = scalar_select %p2001, %s23, 0
          %s2003 = smul.addr %s2002, 2
          %s2004 = scalar_lea.vmem %s7, %s2003
        $region102: #{clip_classifier_forward.1} parent=81 // pred_fallthru
          _
      $region82: #{clip_classifier_forward.1} parent=5 // pred_fallthru
        _
      %p2005 = scmp.le.s32.totalorder 2, %s14
      // Predicated region
      $region103: #{clip_classifier_forward.1} parent=5 // pred_check
        %p2006 = pneg %p2005
      $region104: #{clip_classifier_forward.1} parent=5 // pred_check_branch
        %2008 = sbr.rel (%p2006) target = $region106
      $region105: #{clip_classifier_forward.1} parent=5 // pred_region
        %s2009 = ssub.s32 %s14, 2
      $region106: #{clip_classifier_forward.1} parent=5 // pred_fallthru
        _
    $region6: #{clip_classifier_forward.1} parent=1 // loop_footer
      %s18 = sadd.s32 1, %s14
    $region7: #{clip_classifier_forward.1} parent=1 // loop_footer_branch
      %13 = sbr.rel target = $region3
    $region8: #{clip_classifier_forward.1} parent=1 // loop_exit
      _

</llo_original>
